<compile_context>
chip_gen: v7x
topology: tpu7x:2x2x1
jax: 0.10.0
libtpu: 0.0.40
codegen_flags: <defaults>
</compile_context>

<pallas_src>
import functools

import jax
import jax.numpy as jnp
from jax.experimental import pallas as pl
from jax.experimental.pallas import tpu as pltpu


def _round_up(x, m):
    return ((x + m - 1) // m) * m


def _chunk_timesteps(T, Bpt, max_rows=512):
    """Largest divisor of T whose row chunk (d * Bpt) stays <= max_rows."""
    best = 1
    for d in range(1, T + 1):
        if T % d == 0 and d * Bpt <= max_rows:
            best = d
    return best


def _spec(block_shape, index_map):
    """BlockSpec with single buffering: every block is either visited once or
    revisited unchanged, so the default double-buffering only burns VMEM."""
    try:
        return pl.BlockSpec(block_shape, index_map, pipeline_mode=pl.Buffered(1))
    except (TypeError, AttributeError):  # older jax without pipeline_mode
        return pl.BlockSpec(block_shape, index_map)


# --------------------------- fused model kernel ------------------------------
def _make_fused_rnn_kernel(num_layers, T, T_out, Bpt, Hp, chunk_t,
                           compute_dtype, act_dtype, out_dtype):
    """All RNN layers + FC head in one kernel invocation (one batch tile).

    Ref layout (positional):
      inputs : x_ref (T*Bpt, Dp), then per layer (w_ih, w_hh, bias),
               then fc_w (Hp, Cp), fc_b (1, Cp)
      outputs: out_ref (T_out*Bpt, Cp)
      scratch: slab (T*Bpt, Hp) -- shared by the hoisted projection AND the
               hidden states (strictly in-place, row-wise dependence only).
    """
    rows_per_chunk = chunk_t * Bpt
    n_chunks = T // chunk_t
    U = T if T <= 8 else 8                      # partial-unroll group size
    n_groups, rem = T // U, T % U

    def kernel(*refs):
        x_ref = refs[0]
        layer_refs = refs[1:1 + 3 * num_layers]
        fc_w_ref = refs[1 + 3 * num_layers]
        fc_b_ref = refs[2 + 3 * num_layers]
        out_ref = refs[3 + 3 * num_layers]
        slab = refs[4 + 3 * num_layers]         # (T*Bpt, Hp)

        for l in range(num_layers):
            w_ih_ref = layer_refs[3 * l]        # (Dp, Hp) for l==0 else (Hp, Hp)
            w_hh_ref = layer_refs[3 * l + 1]    # (Hp, Hp)
            bias = layer_refs[3 * l + 2][...].astype(jnp.float32)  # (1, Hp)

            # ---- hoisted input projection (all timesteps, bias folded once) --
            if l == 0:
                proj = jnp.dot(x_ref[...].astype(compute_dtype), w_ih_ref[...],
                               preferred_element_type=jnp.float32) + bias
                slab[...] = proj.astype(act_dtype)   # full overwrite, no stale reads
            else:
                # Row-blocked, in place: each chunk reads its own rows (previous
                # layer's h) and writes its projection back -> only ONE slab live.
                def proj_chunk(c, carry):
                    r = pl.multiple_of(c * rows_per_chunk, rows_per_chunk)
                    h_in = slab[pl.ds(r, rows_per_chunk), :]
                    p = jnp.dot(h_in.astype(compute_dtype), w_ih_ref[...],
                                preferred_element_type=jnp.float32) + bias
                    slab[pl.ds(r, rows_per_chunk), :] = p.astype(act_dtype)
                    return carry

                jax.lax.fori_loop(0, n_chunks, proj_chunk, 0,
                                  unroll=(n_chunks <= 8))

            # ---- sequential tanh recurrence ----------------------------------
            # W_hh is loop-invariant and read through its Ref inside the dot so
            # Mosaic can keep it resident across the unrolled group instead of
            # spilling an Hp x Hp value.
            # TODO(synk): at large Hp, drive the MXU explicitly with
            # pltpu.matmul_push_rhs / matmul_acc_lhs to hold W_hh across steps.
            def step(t, h_prev):
                row = t * Bpt
                if not isinstance(row, int):
                    row = pl.multiple_of(row, Bpt)
                p_t = slab[pl.ds(row, Bpt), :].astype(jnp.float32)
                h_new = jnp.tanh(
                    p_t + jnp.dot(h_prev.astype(compute_dtype), w_hh_ref[...],
                                  preferred_element_type=jnp.float32))
                slab[pl.ds(row, Bpt), :] = h_new.astype(act_dtype)
                return h_new

            def step_group(g, h):
                base = g * U
                for u in range(U):              # partial unroll (LLO visibility)
                    h = step(base + u, h)
                return h

            h = jnp.zeros((Bpt, Hp), jnp.float32)      # zero initial hidden state
            if n_groups == 1 and rem == 0:
                h = step_group(0, h)                    # fully static short seq
            else:
                h = jax.lax.fori_loop(0, n_groups, step_group, h)
                for u in range(rem):
                    h = step(n_groups * U + u, h)

        # ---- FC head: only the last T_out timesteps, lane-dense output ---------
        tail = slab[pl.ds((T - T_out) * Bpt, T_out * Bpt), :]
        out_ref[...] = (
            jnp.dot(tail.astype(compute_dtype), fc_w_ref[...],
                    preferred_element_type=jnp.float32)
            + fc_b_ref[...].astype(jnp.float32)
        ).astype(out_dtype)

    return kernel


# ---------------------- one-time weight layout (hoisted) ----------------------
def prepare_params(params, weight_dtype=jnp.bfloat16):
    """Transpose to (in, out), pad to lane multiples, cast matmul operands.
    Done ONCE outside the serving hot path (biases stay f32)."""
    layers = params["rnn"]
    H = layers[0]["w_ih"].shape[0]
    D_in = layers[0]["w_ih"].shape[1]
    C = params["fc_w"].shape[0]
    Hp = _round_up(H, 128)
    Dp = _round_up(D_in, 128)
    Cp = _round_up(C, 128)

    prepared = {"layers": []}
    for l, layer in enumerate(layers):
        d_l = layer["w_ih"].shape[1]
        d_lp = Dp if l == 0 else Hp
        w_ih = jnp.pad(jnp.asarray(layer["w_ih"], jnp.float32).T,
                       ((0, d_lp - d_l), (0, Hp - H))).astype(weight_dtype)
        w_hh = jnp.pad(jnp.asarray(layer["w_hh"], jnp.float32).T,
                       ((0, Hp - H), (0, Hp - H))).astype(weight_dtype)
        bias = jnp.pad((layer["b_ih"] + layer["b_hh"]).astype(jnp.float32),
                       (0, Hp - H)).reshape(1, Hp)
        prepared["layers"].append({"w_ih": w_ih, "w_hh": w_hh, "bias": bias})
    prepared["fc_w"] = jnp.pad(jnp.asarray(params["fc_w"], jnp.float32).T,
                               ((0, Hp - H), (0, Cp - C))).astype(weight_dtype)
    prepared["fc_b"] = jnp.pad(jnp.asarray(params["fc_b"], jnp.float32),
                               (0, Cp - C)).reshape(1, Cp)
    meta = {"num_classes": C, "input_size": D_in}
    return prepared, meta


# ------------------------------- full model ----------------------------------
def rnn_model_forward(x_btd, weights, *, num_classes, n_ahead=None,
                      act_dtype=None):
    """x_btd: (B, T, D_in) batch-first. Returns (B, T', num_classes)."""
    B, T, D_in = x_btd.shape
    layers = weights["layers"]
    L = len(layers)
    Dp = layers[0]["w_ih"].shape[0]
    Hp = layers[0]["w_hh"].shape[0]
    Cp = weights["fc_w"].shape[1]
    compute_dtype = weights["fc_w"].dtype
    if act_dtype is None:
        act_dtype = compute_dtype                  # bf16 slab on the bf16 path
    assert Dp >= D_in

    T_out = T if n_ahead is None else min(int(n_ahead), T)

    # bf16 activations pack 16 rows per sublane tile -> keep row blocks aligned.
    sub = 8 if jnp.dtype(act_dtype).itemsize == 4 else 16
    Bp0 = _round_up(B, sub)
    n_bt = 2 if Bp0 >= 2 * sub else 1             # batch tiles ("parallel" axis)
    Bpt = _round_up(-(-B // n_bt), sub)
    Bp = Bpt * n_bt

    # Input slab: tile-major / time-major / batch rows, lane-dense.
    # Padded batch rows are zero inputs; their hidden state is NOT zero after
    # step 1 (tanh of the bias), but rows are independent and sliced off.
    x_pad = jnp.pad(x_btd.astype(jnp.float32),
                    ((0, Bp - B), (0, 0), (0, Dp - D_in)))          # (Bp, T, Dp)
    x2d = x_pad.reshape(n_bt, Bpt, T, Dp).transpose(0, 2, 1, 3) \
               .reshape(n_bt * T * Bpt, Dp)

    operands = [x2d]
    in_specs = [_spec((T * Bpt, Dp), lambda b: (b, 0))]
    for layer in layers:
        operands += [layer["w_ih"], layer["w_hh"], layer["bias"]]
        in_specs += [_spec(layer["w_ih"].shape, lambda b: (0, 0)),
                     _spec(layer["w_hh"].shape, lambda b: (0, 0)),
                     _spec(layer["bias"].shape, lambda b: (0, 0))]
    operands += [weights["fc_w"], weights["fc_b"]]
    in_specs += [_spec(weights["fc_w"].shape, lambda b: (0, 0)),
                 _spec(weights["fc_b"].shape, lambda b: (0, 0))]

    chunk_t = _chunk_timesteps(T, Bpt)
    kernel = _make_fused_rnn_kernel(L, T, T_out, Bpt, Hp, chunk_t,
                                    compute_dtype, act_dtype, jnp.float32)

    # VMEM budget: single-buffered operands + output block + one scratch slab,
    # with headroom, capped below v7x's 64 MiB physical VMEM.
    need = sum(int(a.size) * a.dtype.itemsize for a in operands)
    need += T_out * Bpt * Cp * 4
    need += T * Bpt * Hp * jnp.dtype(act_dtype).itemsize
    vmem_limit = int(min(max(2 * need, 32 * 1024 * 1024), 60 * 1024 * 1024))

    out2d = pl.pallas_call(
        kernel,
        out_shape=jax.ShapeDtypeStruct((n_bt * T_out * Bpt, Cp), jnp.float32),
        grid_spec=pltpu.PrefetchScalarGridSpec(
            num_scalar_prefetch=0,
            grid=(n_bt,),
            in_specs=in_specs,
            out_specs=_spec((T_out * Bpt, Cp), lambda b: (b, 0)),
            scratch_shapes=[pltpu.VMEM((T * Bpt, Hp), act_dtype)],
        ),
        compiler_params=pltpu.CompilerParams(
            dimension_semantics=("parallel",),   # batch tiles are independent
            vmem_limit_bytes=vmem_limit,
        ),
    )(*operands)

    out = out2d.reshape(n_bt, T_out, Bpt, Cp).transpose(0, 2, 1, 3) \
               .reshape(Bp, T_out, Cp)[:B, :, :num_classes]
    return out                                    # (B, T_out, C)


# --------------------------- pure-JAX reference ------------------------------
def rnn_model_reference(x_btd, params, n_ahead=None):
    h_seq = jnp.transpose(x_btd, (1, 0, 2)).astype(jnp.float32)  # (T, B, D)
    for layer in params["rnn"]:
        w_ih, w_hh = layer["w_ih"], layer["w_hh"]
        b = layer["b_ih"] + layer["b_hh"]
        B = h_seq.shape[1]
        H = w_ih.shape[0]

        def step(h_prev, x_t):
            h_new = jnp.tanh(x_t @ w_ih.T + h_prev @ w_hh.T + b)
            return h_new, h_new

        _, h_seq = jax.lax.scan(step, jnp.zeros((B, H), jnp.float32), h_seq)
    out = h_seq @ params["fc_w"].T + params["fc_b"]              # (T, B, C)
    out = jnp.transpose(out, (1, 0, 2))
    if n_ahead is not None:
        out = out[:, -n_ahead:, :]
    return out


# ------------------------------ param init -----------------------------------
def init_params(key, input_size, hidden_size, num_layers, num_classes):
    params = {"rnn": []}
    k = 1.0 / jnp.sqrt(hidden_size)
    keys = jax.random.split(key, num_layers * 4 + 2)
    ki = 0
    for layer in range(num_layers):
        d_in = input_size if layer == 0 else hidden_size
        w_ih = jax.random.uniform(keys[ki], (hidden_size, d_in), jnp.float32, -k, k); ki += 1
        w_hh = jax.random.uniform(keys[ki], (hidden_size, hidden_size), jnp.float32, -k, k); ki += 1
        b_ih = jax.random.uniform(keys[ki], (hidden_size,), jnp.float32, -k, k); ki += 1
        b_hh = jax.random.uniform(keys[ki], (hidden_size,), jnp.float32, -k, k); ki += 1
        params["rnn"].append({"w_ih": w_ih, "w_hh": w_hh, "b_ih": b_ih, "b_hh": b_hh})
    params["fc_w"] = jax.random.uniform(keys[ki], (num_classes, hidden_size), jnp.float32, -k, k); ki += 1
    params["fc_b"] = jax.random.uniform(keys[ki], (num_classes,), jnp.float32, -k, k)
    return params


# ---------------------------------- main --------------------------------------
if __name__ == "__main__":
    B, T, D_IN = 2, 8, 4
    HIDDEN, LAYERS, CLASSES = 32, 2, 6
    # TODO(synk): bidirectional=True variant not implemented (module default is False).

    key = jax.random.PRNGKey(0)
    k_param, k_x = jax.random.split(key)
    params = init_params(k_param, D_IN, HIDDEN, LAYERS, CLASSES)
    x = jax.random.normal(k_x, (B, T, D_IN), jnp.float32)

    ref = rnn_model_reference(x, params, n_ahead=None)

    # ---- f32 matmul operands: tight numerical check -------------------------
    w32, meta = prepare_params(params, weight_dtype=jnp.float32)
    fwd = jax.jit(functools.partial(rnn_model_forward,
                                    num_classes=meta["num_classes"],
                                    n_ahead=None))
    out32 = jax.block_until_ready(fwd(x, w32))
    assert out32.shape == (B, T, CLASSES), out32.shape
    assert jnp.allclose(out32, ref, atol=1e-4, rtol=1e-4), \
        float(jnp.max(jnp.abs(out32 - ref)))

    # ---- bf16 matmul operands + bf16 activation slab (perf path) ------------
    wbf, _ = prepare_params(params, weight_dtype=jnp.bfloat16)
    outbf = jax.block_until_ready(fwd(x, wbf))
    assert outbf.shape == (B, T, CLASSES), outbf.shape
    assert jnp.allclose(outbf, ref, atol=5e-2, rtol=5e-2), \
        float(jnp.max(jnp.abs(outbf - ref)))

    # ---- n_ahead path: FC head / output only over the last n_ahead steps ----
    N_AHEAD = 3
    fwd_na = jax.jit(functools.partial(rnn_model_forward,
                                       num_classes=meta["num_classes"],
                                       n_ahead=N_AHEAD))
    out_na = jax.block_until_ready(fwd_na(x, w32))
    ref_na = rnn_model_reference(x, params, n_ahead=N_AHEAD)
    assert out_na.shape == (B, N_AHEAD, CLASSES), out_na.shape
    assert jnp.allclose(out_na, ref_na, atol=1e-4, rtol=1e-4), \
        float(jnp.max(jnp.abs(out_na - ref_na)))

    print("KERNEL_OK")
</pallas_src>

<mosaic_0001>
module attributes {stable_mosaic.version = 11 : i64} {
  func.func @kernel(%arg0: i32, %arg1: memref<64x128xf32, #tpu.memory_space<vmem>>, %arg2: memref<128x128xf32, #tpu.memory_space<vmem>>, %arg3: memref<128x128xf32, #tpu.memory_space<vmem>>, %arg4: memref<1x128xf32, #tpu.memory_space<vmem>>, %arg5: memref<128x128xf32, #tpu.memory_space<vmem>>, %arg6: memref<128x128xf32, #tpu.memory_space<vmem>>, %arg7: memref<1x128xf32, #tpu.memory_space<vmem>>, %arg8: memref<128x128xf32, #tpu.memory_space<vmem>>, %arg9: memref<1x128xf32, #tpu.memory_space<vmem>>, %arg10: memref<64x128xf32, #tpu.memory_space<vmem>>, %arg11: memref<64x128xf32, #tpu.memory_space<vmem>>) attributes {dimension_semantics = [#tpu.dimension_semantics<parallel>], iteration_bounds = array<i64: 1>, scalar_prefetch = 0 : i64, scratch_operands = 1 : i64, tpu.core_type = #tpu.core_type<tc>, window_params = [{pipeline_mode = #tpu.pipeline_mode<synchronous>, transform_indices = @transform_0, window_bounds = array<i64: 64, 128>}, {pipeline_mode = #tpu.pipeline_mode<synchronous>, transform_indices = @transform_1, window_bounds = array<i64: 128, 128>}, {pipeline_mode = #tpu.pipeline_mode<synchronous>, transform_indices = @transform_2, window_bounds = array<i64: 128, 128>}, {pipeline_mode = #tpu.pipeline_mode<synchronous>, transform_indices = @transform_3, window_bounds = array<i64: 1, 128>}, {pipeline_mode = #tpu.pipeline_mode<synchronous>, transform_indices = @transform_4, window_bounds = array<i64: 128, 128>}, {pipeline_mode = #tpu.pipeline_mode<synchronous>, transform_indices = @transform_5, window_bounds = array<i64: 128, 128>}, {pipeline_mode = #tpu.pipeline_mode<synchronous>, transform_indices = @transform_6, window_bounds = array<i64: 1, 128>}, {pipeline_mode = #tpu.pipeline_mode<synchronous>, transform_indices = @transform_7, window_bounds = array<i64: 128, 128>}, {pipeline_mode = #tpu.pipeline_mode<synchronous>, transform_indices = @transform_8, window_bounds = array<i64: 1, 128>}, {pipeline_mode = #tpu.pipeline_mode<synchronous>, transform_indices = @transform_9, window_bounds = array<i64: 64, 128>}]} {
    %c0 = arith.constant 0 : index
    %c0_0 = arith.constant 0 : index
    %0 = vector.load %arg4[%c0, %c0_0] : memref<1x128xf32, #tpu.memory_space<vmem>>, vector<1x128xf32>
    %c0_1 = arith.constant 0 : index
    %c0_2 = arith.constant 0 : index
    %1 = vector.load %arg1[%c0_1, %c0_2] : memref<64x128xf32, #tpu.memory_space<vmem>>, vector<64x128xf32>
    %c0_3 = arith.constant 0 : index
    %c0_4 = arith.constant 0 : index
    %2 = vector.load %arg2[%c0_3, %c0_4] : memref<128x128xf32, #tpu.memory_space<vmem>>, vector<128x128xf32>
    %cst = arith.constant dense<0.000000e+00> : vector<64x128xf32>
    %3 = tpu.matmul %1, %2, %cst {dimension_numbers = #tpu.dot_dimension_numbers<[1], [0], [0], [1], [0, 0, 1, 1], [], []>} : vector<64x128xf32>, vector<128x128xf32>, vector<64x128xf32> -> vector<64x128xf32>
    %4 = vector.broadcast %0 : vector<1x128xf32> to vector<64x128xf32>
    %5 = arith.addf %3, %4 : vector<64x128xf32>
    %c0_5 = arith.constant 0 : index
    %c0_6 = arith.constant 0 : index
    %6 = vector.load %arg11[%c0_5, %c0_6] : memref<64x128xf32, #tpu.memory_space<vmem>>, vector<64x128xf32>
    tpu.vector_store %arg11[%c0_5, %c0_6], %5 {strides = array<i32>} : memref<64x128xf32, #tpu.memory_space<vmem>>, vector<64x128xf32>,
    %cst_7 = arith.constant 0.000000e+00 : f32
    %7 = vector.broadcast %cst_7 : f32 to vector<8x128xf32>
    %c0_8 = arith.constant 0 : index
    %c0_9 = arith.constant 0 : index
    %8 = vector.load %arg11[%c0_8, %c0_9] : memref<64x128xf32, #tpu.memory_space<vmem>>, vector<8x128xf32>
    %c0_10 = arith.constant 0 : index
    %c0_11 = arith.constant 0 : index
    %9 = vector.load %arg3[%c0_10, %c0_11] : memref<128x128xf32, #tpu.memory_space<vmem>>, vector<128x128xf32>
    %cst_12 = arith.constant dense<0.000000e+00> : vector<8x128xf32>
    %10 = tpu.matmul %7, %9, %cst_12 {dimension_numbers = #tpu.dot_dimension_numbers<[1], [0], [0], [1], [0, 0, 1, 1], [], []>} : vector<8x128xf32>, vector<128x128xf32>, vector<8x128xf32> -> vector<8x128xf32>
    %11 = arith.addf %8, %10 : vector<8x128xf32>
    %12 = math.tanh %11 : vector<8x128xf32>
    %c0_13 = arith.constant 0 : index
    %c0_14 = arith.constant 0 : index
    %13 = vector.load %arg11[%c0_13, %c0_14] : memref<64x128xf32, #tpu.memory_space<vmem>>, vector<8x128xf32>
    tpu.vector_store %arg11[%c0_13, %c0_14], %12 {strides = array<i32>} : memref<64x128xf32, #tpu.memory_space<vmem>>, vector<8x128xf32>,
    %c8 = arith.constant 8 : index
    %c0_15 = arith.constant 0 : index
    %14 = vector.load %arg11[%c8, %c0_15] : memref<64x128xf32, #tpu.memory_space<vmem>>, vector<8x128xf32>
    %c0_16 = arith.constant 0 : index
    %c0_17 = arith.constant 0 : index
    %15 = vector.load %arg3[%c0_16, %c0_17] : memref<128x128xf32, #tpu.memory_space<vmem>>, vector<128x128xf32>
    %cst_18 = arith.constant dense<0.000000e+00> : vector<8x128xf32>
    %16 = tpu.matmul %12, %15, %cst_18 {dimension_numbers = #tpu.dot_dimension_numbers<[1], [0], [0], [1], [0, 0, 1, 1], [], []>} : vector<8x128xf32>, vector<128x128xf32>, vector<8x128xf32> -> vector<8x128xf32>
    %17 = arith.addf %14, %16 : vector<8x128xf32>
    %18 = math.tanh %17 : vector<8x128xf32>
    %c8_19 = arith.constant 8 : index
    %c0_20 = arith.constant 0 : index
    %19 = vector.load %arg11[%c8_19, %c0_20] : memref<64x128xf32, #tpu.memory_space<vmem>>, vector<8x128xf32>
    tpu.vector_store %arg11[%c8_19, %c0_20], %18 {strides = array<i32>} : memref<64x128xf32, #tpu.memory_space<vmem>>, vector<8x128xf32>,
    %c16 = arith.constant 16 : index
    %c0_21 = arith.constant 0 : index
    %20 = vector.load %arg11[%c16, %c0_21] : memref<64x128xf32, #tpu.memory_space<vmem>>, vector<8x128xf32>
    %c0_22 = arith.constant 0 : index
    %c0_23 = arith.constant 0 : index
    %21 = vector.load %arg3[%c0_22, %c0_23] : memref<128x128xf32, #tpu.memory_space<vmem>>, vector<128x128xf32>
    %cst_24 = arith.constant dense<0.000000e+00> : vector<8x128xf32>
    %22 = tpu.matmul %18, %21, %cst_24 {dimension_numbers = #tpu.dot_dimension_numbers<[1], [0], [0], [1], [0, 0, 1, 1], [], []>} : vector<8x128xf32>, vector<128x128xf32>, vector<8x128xf32> -> vector<8x128xf32>
    %23 = arith.addf %20, %22 : vector<8x128xf32>
    %24 = math.tanh %23 : vector<8x128xf32>
    %c16_25 = arith.constant 16 : index
    %c0_26 = arith.constant 0 : index
    %25 = vector.load %arg11[%c16_25, %c0_26] : memref<64x128xf32, #tpu.memory_space<vmem>>, vector<8x128xf32>
    tpu.vector_store %arg11[%c16_25, %c0_26], %24 {strides = array<i32>} : memref<64x128xf32, #tpu.memory_space<vmem>>, vector<8x128xf32>,
    %c24 = arith.constant 24 : index
    %c0_27 = arith.constant 0 : index
    %26 = vector.load %arg11[%c24, %c0_27] : memref<64x128xf32, #tpu.memory_space<vmem>>, vector<8x128xf32>
    %c0_28 = arith.constant 0 : index
    %c0_29 = arith.constant 0 : index
    %27 = vector.load %arg3[%c0_28, %c0_29] : memref<128x128xf32, #tpu.memory_space<vmem>>, vector<128x128xf32>
    %cst_30 = arith.constant dense<0.000000e+00> : vector<8x128xf32>
    %28 = tpu.matmul %24, %27, %cst_30 {dimension_numbers = #tpu.dot_dimension_numbers<[1], [0], [0], [1], [0, 0, 1, 1], [], []>} : vector<8x128xf32>, vector<128x128xf32>, vector<8x128xf32> -> vector<8x128xf32>
    %29 = arith.addf %26, %28 : vector<8x128xf32>
    %30 = math.tanh %29 : vector<8x128xf32>
    %c24_31 = arith.constant 24 : index
    %c0_32 = arith.constant 0 : index
    %31 = vector.load %arg11[%c24_31, %c0_32] : memref<64x128xf32, #tpu.memory_space<vmem>>, vector<8x128xf32>
    tpu.vector_store %arg11[%c24_31, %c0_32], %30 {strides = array<i32>} : memref<64x128xf32, #tpu.memory_space<vmem>>, vector<8x128xf32>,
    %c32 = arith.constant 32 : index
    %c0_33 = arith.constant 0 : index
    %32 = vector.load %arg11[%c32, %c0_33] : memref<64x128xf32, #tpu.memory_space<vmem>>, vector<8x128xf32>
    %c0_34 = arith.constant 0 : index
    %c0_35 = arith.constant 0 : index
    %33 = vector.load %arg3[%c0_34, %c0_35] : memref<128x128xf32, #tpu.memory_space<vmem>>, vector<128x128xf32>
    %cst_36 = arith.constant dense<0.000000e+00> : vector<8x128xf32>
    %34 = tpu.matmul %30, %33, %cst_36 {dimension_numbers = #tpu.dot_dimension_numbers<[1], [0], [0], [1], [0, 0, 1, 1], [], []>} : vector<8x128xf32>, vector<128x128xf32>, vector<8x128xf32> -> vector<8x128xf32>
    %35 = arith.addf %32, %34 : vector<8x128xf32>
    %36 = math.tanh %35 : vector<8x128xf32>
    %c32_37 = arith.constant 32 : index
    %c0_38 = arith.constant 0 : index
    %37 = vector.load %arg11[%c32_37, %c0_38] : memref<64x128xf32, #tpu.memory_space<vmem>>, vector<8x128xf32>
    tpu.vector_store %arg11[%c32_37, %c0_38], %36 {strides = array<i32>} : memref<64x128xf32, #tpu.memory_space<vmem>>, vector<8x128xf32>,
    %c40 = arith.constant 40 : index
    %c0_39 = arith.constant 0 : index
    %38 = vector.load %arg11[%c40, %c0_39] : memref<64x128xf32, #tpu.memory_space<vmem>>, vector<8x128xf32>
    %c0_40 = arith.constant 0 : index
    %c0_41 = arith.constant 0 : index
    %39 = vector.load %arg3[%c0_40, %c0_41] : memref<128x128xf32, #tpu.memory_space<vmem>>, vector<128x128xf32>
    %cst_42 = arith.constant dense<0.000000e+00> : vector<8x128xf32>
    %40 = tpu.matmul %36, %39, %cst_42 {dimension_numbers = #tpu.dot_dimension_numbers<[1], [0], [0], [1], [0, 0, 1, 1], [], []>} : vector<8x128xf32>, vector<128x128xf32>, vector<8x128xf32> -> vector<8x128xf32>
    %41 = arith.addf %38, %40 : vector<8x128xf32>
    %42 = math.tanh %41 : vector<8x128xf32>
    %c40_43 = arith.constant 40 : index
    %c0_44 = arith.constant 0 : index
    %43 = vector.load %arg11[%c40_43, %c0_44] : memref<64x128xf32, #tpu.memory_space<vmem>>, vector<8x128xf32>
    tpu.vector_store %arg11[%c40_43, %c0_44], %42 {strides = array<i32>} : memref<64x128xf32, #tpu.memory_space<vmem>>, vector<8x128xf32>,
    %c48 = arith.constant 48 : index
    %c0_45 = arith.constant 0 : index
    %44 = vector.load %arg11[%c48, %c0_45] : memref<64x128xf32, #tpu.memory_space<vmem>>, vector<8x128xf32>
    %c0_46 = arith.constant 0 : index
    %c0_47 = arith.constant 0 : index
    %45 = vector.load %arg3[%c0_46, %c0_47] : memref<128x128xf32, #tpu.memory_space<vmem>>, vector<128x128xf32>
    %cst_48 = arith.constant dense<0.000000e+00> : vector<8x128xf32>
    %46 = tpu.matmul %42, %45, %cst_48 {dimension_numbers = #tpu.dot_dimension_numbers<[1], [0], [0], [1], [0, 0, 1, 1], [], []>} : vector<8x128xf32>, vector<128x128xf32>, vector<8x128xf32> -> vector<8x128xf32>
    %47 = arith.addf %44, %46 : vector<8x128xf32>
    %48 = math.tanh %47 : vector<8x128xf32>
    %c48_49 = arith.constant 48 : index
    %c0_50 = arith.constant 0 : index
    %49 = vector.load %arg11[%c48_49, %c0_50] : memref<64x128xf32, #tpu.memory_space<vmem>>, vector<8x128xf32>
    tpu.vector_store %arg11[%c48_49, %c0_50], %48 {strides = array<i32>} : memref<64x128xf32, #tpu.memory_space<vmem>>, vector<8x128xf32>,
    %c56 = arith.constant 56 : index
    %c0_51 = arith.constant 0 : index
    %50 = vector.load %arg11[%c56, %c0_51] : memref<64x128xf32, #tpu.memory_space<vmem>>, vector<8x128xf32>
    %c0_52 = arith.constant 0 : index
    %c0_53 = arith.constant 0 : index
    %51 = vector.load %arg3[%c0_52, %c0_53] : memref<128x128xf32, #tpu.memory_space<vmem>>, vector<128x128xf32>
    %cst_54 = arith.constant dense<0.000000e+00> : vector<8x128xf32>
    %52 = tpu.matmul %48, %51, %cst_54 {dimension_numbers = #tpu.dot_dimension_numbers<[1], [0], [0], [1], [0, 0, 1, 1], [], []>} : vector<8x128xf32>, vector<128x128xf32>, vector<8x128xf32> -> vector<8x128xf32>
    %53 = arith.addf %50, %52 : vector<8x128xf32>
    %54 = math.tanh %53 : vector<8x128xf32>
    %c56_55 = arith.constant 56 : index
    %c0_56 = arith.constant 0 : index
    %55 = vector.load %arg11[%c56_55, %c0_56] : memref<64x128xf32, #tpu.memory_space<vmem>>, vector<8x128xf32>
    tpu.vector_store %arg11[%c56_55, %c0_56], %54 {strides = array<i32>} : memref<64x128xf32, #tpu.memory_space<vmem>>, vector<8x128xf32>,
    %c0_57 = arith.constant 0 : index
    %c0_58 = arith.constant 0 : index
    %56 = vector.load %arg7[%c0_57, %c0_58] : memref<1x128xf32, #tpu.memory_space<vmem>>, vector<1x128xf32>
    %c0_i32 = arith.constant 0 : i32
    %c64_i32 = arith.constant 64 : i32
    %57 = arith.muli %c0_i32, %c64_i32 : i32
    %58 = tpu.assume_multiple %57, 64 : i32
    %59 = arith.index_cast %58 : i32 to index
    %c0_59 = arith.constant 0 : index
    %60 = vector.load %arg11[%59, %c0_59] : memref<64x128xf32, #tpu.memory_space<vmem>>, vector<64x128xf32>
    %c0_60 = arith.constant 0 : index
    %c0_61 = arith.constant 0 : index
    %61 = vector.load %arg5[%c0_60, %c0_61] : memref<128x128xf32, #tpu.memory_space<vmem>>, vector<128x128xf32>
    %cst_62 = arith.constant dense<0.000000e+00> : vector<64x128xf32>
    %62 = tpu.matmul %60, %61, %cst_62 {dimension_numbers = #tpu.dot_dimension_numbers<[1], [0], [0], [1], [0, 0, 1, 1], [], []>} : vector<64x128xf32>, vector<128x128xf32>, vector<64x128xf32> -> vector<64x128xf32>
    %63 = vector.broadcast %56 : vector<1x128xf32> to vector<64x128xf32>
    %64 = arith.addf %62, %63 : vector<64x128xf32>
    %65 = arith.index_cast %58 : i32 to index
    %c0_63 = arith.constant 0 : index
    %66 = vector.load %arg11[%65, %c0_63] : memref<64x128xf32, #tpu.memory_space<vmem>>, vector<64x128xf32>
    tpu.vector_store %arg11[%65, %c0_63], %64 {strides = array<i32>} : memref<64x128xf32, #tpu.memory_space<vmem>>, vector<64x128xf32>,
    %c1_i32 = arith.constant 1 : i32
    %cst_64 = arith.constant 0.000000e+00 : f32
    %67 = vector.broadcast %cst_64 : f32 to vector<8x128xf32>
    %c0_65 = arith.constant 0 : index
    %c0_66 = arith.constant 0 : index
    %68 = vector.load %arg11[%c0_65, %c0_66] : memref<64x128xf32, #tpu.memory_space<vmem>>, vector<8x128xf32>
    %c0_67 = arith.constant 0 : index
    %c0_68 = arith.constant 0 : index
    %69 = vector.load %arg6[%c0_67, %c0_68] : memref<128x128xf32, #tpu.memory_space<vmem>>, vector<128x128xf32>
    %cst_69 = arith.constant dense<0.000000e+00> : vector<8x128xf32>
    %70 = tpu.matmul %67, %69, %cst_69 {dimension_numbers = #tpu.dot_dimension_numbers<[1], [0], [0], [1], [0, 0, 1, 1], [], []>} : vector<8x128xf32>, vector<128x128xf32>, vector<8x128xf32> -> vector<8x128xf32>
    %71 = arith.addf %68, %70 : vector<8x128xf32>
    %72 = math.tanh %71 : vector<8x128xf32>
    %c0_70 = arith.constant 0 : index
    %c0_71 = arith.constant 0 : index
    %73 = vector.load %arg11[%c0_70, %c0_71] : memref<64x128xf32, #tpu.memory_space<vmem>>, vector<8x128xf32>
    tpu.vector_store %arg11[%c0_70, %c0_71], %72 {strides = array<i32>} : memref<64x128xf32, #tpu.memory_space<vmem>>, vector<8x128xf32>,
    %c8_72 = arith.constant 8 : index
    %c0_73 = arith.constant 0 : index
    %74 = vector.load %arg11[%c8_72, %c0_73] : memref<64x128xf32, #tpu.memory_space<vmem>>, vector<8x128xf32>
    %c0_74 = arith.constant 0 : index
    %c0_75 = arith.constant 0 : index
    %75 = vector.load %arg6[%c0_74, %c0_75] : memref<128x128xf32, #tpu.memory_space<vmem>>, vector<128x128xf32>
    %cst_76 = arith.constant dense<0.000000e+00> : vector<8x128xf32>
    %76 = tpu.matmul %72, %75, %cst_76 {dimension_numbers = #tpu.dot_dimension_numbers<[1], [0], [0], [1], [0, 0, 1, 1], [], []>} : vector<8x128xf32>, vector<128x128xf32>, vector<8x128xf32> -> vector<8x128xf32>
    %77 = arith.addf %74, %76 : vector<8x128xf32>
    %78 = math.tanh %77 : vector<8x128xf32>
    %c8_77 = arith.constant 8 : index
    %c0_78 = arith.constant 0 : index
    %79 = vector.load %arg11[%c8_77, %c0_78] : memref<64x128xf32, #tpu.memory_space<vmem>>, vector<8x128xf32>
    tpu.vector_store %arg11[%c8_77, %c0_78], %78 {strides = array<i32>} : memref<64x128xf32, #tpu.memory_space<vmem>>, vector<8x128xf32>,
    %c16_79 = arith.constant 16 : index
    %c0_80 = arith.constant 0 : index
    %80 = vector.load %arg11[%c16_79, %c0_80] : memref<64x128xf32, #tpu.memory_space<vmem>>, vector<8x128xf32>
    %c0_81 = arith.constant 0 : index
    %c0_82 = arith.constant 0 : index
    %81 = vector.load %arg6[%c0_81, %c0_82] : memref<128x128xf32, #tpu.memory_space<vmem>>, vector<128x128xf32>
    %cst_83 = arith.constant dense<0.000000e+00> : vector<8x128xf32>
    %82 = tpu.matmul %78, %81, %cst_83 {dimension_numbers = #tpu.dot_dimension_numbers<[1], [0], [0], [1], [0, 0, 1, 1], [], []>} : vector<8x128xf32>, vector<128x128xf32>, vector<8x128xf32> -> vector<8x128xf32>
    %83 = arith.addf %80, %82 : vector<8x128xf32>
    %84 = math.tanh %83 : vector<8x128xf32>
    %c16_84 = arith.constant 16 : index
    %c0_85 = arith.constant 0 : index
    %85 = vector.load %arg11[%c16_84, %c0_85] : memref<64x128xf32, #tpu.memory_space<vmem>>, vector<8x128xf32>
    tpu.vector_store %arg11[%c16_84, %c0_85], %84 {strides = array<i32>} : memref<64x128xf32, #tpu.memory_space<vmem>>, vector<8x128xf32>,
    %c24_86 = arith.constant 24 : index
    %c0_87 = arith.constant 0 : index
    %86 = vector.load %arg11[%c24_86, %c0_87] : memref<64x128xf32, #tpu.memory_space<vmem>>, vector<8x128xf32>
    %c0_88 = arith.constant 0 : index
    %c0_89 = arith.constant 0 : index
    %87 = vector.load %arg6[%c0_88, %c0_89] : memref<128x128xf32, #tpu.memory_space<vmem>>, vector<128x128xf32>
    %cst_90 = arith.constant dense<0.000000e+00> : vector<8x128xf32>
    %88 = tpu.matmul %84, %87, %cst_90 {dimension_numbers = #tpu.dot_dimension_numbers<[1], [0], [0], [1], [0, 0, 1, 1], [], []>} : vector<8x128xf32>, vector<128x128xf32>, vector<8x128xf32> -> vector<8x128xf32>
    %89 = arith.addf %86, %88 : vector<8x128xf32>
    %90 = math.tanh %89 : vector<8x128xf32>
    %c24_91 = arith.constant 24 : index
    %c0_92 = arith.constant 0 : index
    %91 = vector.load %arg11[%c24_91, %c0_92] : memref<64x128xf32, #tpu.memory_space<vmem>>, vector<8x128xf32>
    tpu.vector_store %arg11[%c24_91, %c0_92], %90 {strides = array<i32>} : memref<64x128xf32, #tpu.memory_space<vmem>>, vector<8x128xf32>,
    %c32_93 = arith.constant 32 : index
    %c0_94 = arith.constant 0 : index
    %92 = vector.load %arg11[%c32_93, %c0_94] : memref<64x128xf32, #tpu.memory_space<vmem>>, vector<8x128xf32>
    %c0_95 = arith.constant 0 : index
    %c0_96 = arith.constant 0 : index
    %93 = vector.load %arg6[%c0_95, %c0_96] : memref<128x128xf32, #tpu.memory_space<vmem>>, vector<128x128xf32>
    %cst_97 = arith.constant dense<0.000000e+00> : vector<8x128xf32>
    %94 = tpu.matmul %90, %93, %cst_97 {dimension_numbers = #tpu.dot_dimension_numbers<[1], [0], [0], [1], [0, 0, 1, 1], [], []>} : vector<8x128xf32>, vector<128x128xf32>, vector<8x128xf32> -> vector<8x128xf32>
    %95 = arith.addf %92, %94 : vector<8x128xf32>
    %96 = math.tanh %95 : vector<8x128xf32>
    %c32_98 = arith.constant 32 : index
    %c0_99 = arith.constant 0 : index
    %97 = vector.load %arg11[%c32_98, %c0_99] : memref<64x128xf32, #tpu.memory_space<vmem>>, vector<8x128xf32>
    tpu.vector_store %arg11[%c32_98, %c0_99], %96 {strides = array<i32>} : memref<64x128xf32, #tpu.memory_space<vmem>>, vector<8x128xf32>,
    %c40_100 = arith.constant 40 : index
    %c0_101 = arith.constant 0 : index
    %98 = vector.load %arg11[%c40_100, %c0_101] : memref<64x128xf32, #tpu.memory_space<vmem>>, vector<8x128xf32>
    %c0_102 = arith.constant 0 : index
    %c0_103 = arith.constant 0 : index
    %99 = vector.load %arg6[%c0_102, %c0_103] : memref<128x128xf32, #tpu.memory_space<vmem>>, vector<128x128xf32>
    %cst_104 = arith.constant dense<0.000000e+00> : vector<8x128xf32>
    %100 = tpu.matmul %96, %99, %cst_104 {dimension_numbers = #tpu.dot_dimension_numbers<[1], [0], [0], [1], [0, 0, 1, 1], [], []>} : vector<8x128xf32>, vector<128x128xf32>, vector<8x128xf32> -> vector<8x128xf32>
    %101 = arith.addf %98, %100 : vector<8x128xf32>
    %102 = math.tanh %101 : vector<8x128xf32>
    %c40_105 = arith.constant 40 : index
    %c0_106 = arith.constant 0 : index
    %103 = vector.load %arg11[%c40_105, %c0_106] : memref<64x128xf32, #tpu.memory_space<vmem>>, vector<8x128xf32>
    tpu.vector_store %arg11[%c40_105, %c0_106], %102 {strides = array<i32>} : memref<64x128xf32, #tpu.memory_space<vmem>>, vector<8x128xf32>,
    %c48_107 = arith.constant 48 : index
    %c0_108 = arith.constant 0 : index
    %104 = vector.load %arg11[%c48_107, %c0_108] : memref<64x128xf32, #tpu.memory_space<vmem>>, vector<8x128xf32>
    %c0_109 = arith.constant 0 : index
    %c0_110 = arith.constant 0 : index
    %105 = vector.load %arg6[%c0_109, %c0_110] : memref<128x128xf32, #tpu.memory_space<vmem>>, vector<128x128xf32>
    %cst_111 = arith.constant dense<0.000000e+00> : vector<8x128xf32>
    %106 = tpu.matmul %102, %105, %cst_111 {dimension_numbers = #tpu.dot_dimension_numbers<[1], [0], [0], [1], [0, 0, 1, 1], [], []>} : vector<8x128xf32>, vector<128x128xf32>, vector<8x128xf32> -> vector<8x128xf32>
    %107 = arith.addf %104, %106 : vector<8x128xf32>
    %108 = math.tanh %107 : vector<8x128xf32>
    %c48_112 = arith.constant 48 : index
    %c0_113 = arith.constant 0 : index
    %109 = vector.load %arg11[%c48_112, %c0_113] : memref<64x128xf32, #tpu.memory_space<vmem>>, vector<8x128xf32>
    tpu.vector_store %arg11[%c48_112, %c0_113], %108 {strides = array<i32>} : memref<64x128xf32, #tpu.memory_space<vmem>>, vector<8x128xf32>,
    %c56_114 = arith.constant 56 : index
    %c0_115 = arith.constant 0 : index
    %110 = vector.load %arg11[%c56_114, %c0_115] : memref<64x128xf32, #tpu.memory_space<vmem>>, vector<8x128xf32>
    %c0_116 = arith.constant 0 : index
    %c0_117 = arith.constant 0 : index
    %111 = vector.load %arg6[%c0_116, %c0_117] : memref<128x128xf32, #tpu.memory_space<vmem>>, vector<128x128xf32>
    %cst_118 = arith.constant dense<0.000000e+00> : vector<8x128xf32>
    %112 = tpu.matmul %108, %111, %cst_118 {dimension_numbers = #tpu.dot_dimension_numbers<[1], [0], [0], [1], [0, 0, 1, 1], [], []>} : vector<8x128xf32>, vector<128x128xf32>, vector<8x128xf32> -> vector<8x128xf32>
    %113 = arith.addf %110, %112 : vector<8x128xf32>
    %114 = math.tanh %113 : vector<8x128xf32>
    %c56_119 = arith.constant 56 : index
    %c0_120 = arith.constant 0 : index
    %115 = vector.load %arg11[%c56_119, %c0_120] : memref<64x128xf32, #tpu.memory_space<vmem>>, vector<8x128xf32>
    tpu.vector_store %arg11[%c56_119, %c0_120], %114 {strides = array<i32>} : memref<64x128xf32, #tpu.memory_space<vmem>>, vector<8x128xf32>,
    %c0_121 = arith.constant 0 : index
    %c0_122 = arith.constant 0 : index
    %116 = vector.load %arg11[%c0_121, %c0_122] : memref<64x128xf32, #tpu.memory_space<vmem>>, vector<64x128xf32>
    %c0_123 = arith.constant 0 : index
    %c0_124 = arith.constant 0 : index
    %117 = vector.load %arg8[%c0_123, %c0_124] : memref<128x128xf32, #tpu.memory_space<vmem>>, vector<128x128xf32>
    %cst_125 = arith.constant dense<0.000000e+00> : vector<64x128xf32>
    %118 = tpu.matmul %116, %117, %cst_125 {dimension_numbers = #tpu.dot_dimension_numbers<[1], [0], [0], [1], [0, 0, 1, 1], [], []>} : vector<64x128xf32>, vector<128x128xf32>, vector<64x128xf32> -> vector<64x128xf32>
    %c0_126 = arith.constant 0 : index
    %c0_127 = arith.constant 0 : index
    %119 = vector.load %arg9[%c0_126, %c0_127] : memref<1x128xf32, #tpu.memory_space<vmem>>, vector<1x128xf32>
    %120 = vector.broadcast %119 : vector<1x128xf32> to vector<64x128xf32>
    %121 = arith.addf %118, %120 : vector<64x128xf32>
    %c0_128 = arith.constant 0 : index
    %c0_129 = arith.constant 0 : index
    %122 = vector.load %arg10[%c0_128, %c0_129] : memref<64x128xf32, #tpu.memory_space<vmem>>, vector<64x128xf32>
    tpu.vector_store %arg10[%c0_128, %c0_129], %121 {strides = array<i32>} : memref<64x128xf32, #tpu.memory_space<vmem>>, vector<64x128xf32>,
    return
  }
  func.func @transform_0(%arg0: i32) -> (i32, i32) {
    %c0_i32 = arith.constant 0 : i32
    %c0_i32_0 = arith.constant 0 : i32
    return %arg0, %c0_i32 : i32, i32
  }
  func.func @transform_1(%arg0: i32) -> (i32, i32) {
    %c0_i32 = arith.constant 0 : i32
    %c0_i32_0 = arith.constant 0 : i32
    %c0_i32_1 = arith.constant 0 : i32
    return %c0_i32, %c0_i32_0 : i32, i32
  }
  func.func @transform_2(%arg0: i32) -> (i32, i32) {
    %c0_i32 = arith.constant 0 : i32
    %c0_i32_0 = arith.constant 0 : i32
    %c0_i32_1 = arith.constant 0 : i32
    return %c0_i32, %c0_i32_0 : i32, i32
  }
  func.func @transform_3(%arg0: i32) -> (i32, i32) {
    %c0_i32 = arith.constant 0 : i32
    %c0_i32_0 = arith.constant 0 : i32
    %c0_i32_1 = arith.constant 0 : i32
    return %c0_i32, %c0_i32_0 : i32, i32
  }
  func.func @transform_4(%arg0: i32) -> (i32, i32) {
    %c0_i32 = arith.constant 0 : i32
    %c0_i32_0 = arith.constant 0 : i32
    %c0_i32_1 = arith.constant 0 : i32
    return %c0_i32, %c0_i32_0 : i32, i32
  }
  func.func @transform_5(%arg0: i32) -> (i32, i32) {
    %c0_i32 = arith.constant 0 : i32
    %c0_i32_0 = arith.constant 0 : i32
    %c0_i32_1 = arith.constant 0 : i32
    return %c0_i32, %c0_i32_0 : i32, i32
  }
  func.func @transform_6(%arg0: i32) -> (i32, i32) {
    %c0_i32 = arith.constant 0 : i32
    %c0_i32_0 = arith.constant 0 : i32
    %c0_i32_1 = arith.constant 0 : i32
    return %c0_i32, %c0_i32_0 : i32, i32
  }
  func.func @transform_7(%arg0: i32) -> (i32, i32) {
    %c0_i32 = arith.constant 0 : i32
    %c0_i32_0 = arith.constant 0 : i32
    %c0_i32_1 = arith.constant 0 : i32
    return %c0_i32, %c0_i32_0 : i32, i32
  }
  func.func @transform_8(%arg0: i32) -> (i32, i32) {
    %c0_i32 = arith.constant 0 : i32
    %c0_i32_0 = arith.constant 0 : i32
    %c0_i32_1 = arith.constant 0 : i32
    return %c0_i32, %c0_i32_0 : i32, i32
  }
  func.func @transform_9(%arg0: i32) -> (i32, i32) {
    %c0_i32 = arith.constant 0 : i32
    %c0_i32_0 = arith.constant 0 : i32
    return %arg0, %c0_i32 : i32, i32
  }
}

</mosaic_0001>

<llo_original>
// kernel: rnn_model_forward.1
$region0: #{rnn_model_forward.1}
  #allocation0 [shape = 'u32[]', space=smem, size = 0x4, offset = 0x4, fixed_abs, tag = 'smem constant byte address 0x4 - core index']
  #allocation1 [shape = 'u32[144,128]{1,0:T(1,128)}', space=vmem, size = 0x12000, scoped, tag = 'internal scratch']
  #allocation2 [shape = 'f32[64,128]{1,0:T(8,128)}', space=vmem, size = 0x8000, scoped, tag = 'scratch operand']
  %s0 = inlined_call_operand.vmem [shape: f32[64,128], index: 0, kind: input, shape index: {}]
  %s1 = inlined_call_operand.vmem [shape: f32[128,128], index: 1, kind: input, shape index: {}]
  %s2 = inlined_call_operand.vmem [shape: f32[128,128], index: 2, kind: input, shape index: {}]
  %s3 = inlined_call_operand.vmem [shape: f32[1,128], index: 3, kind: input, shape index: {}]
  %s4 = inlined_call_operand.vmem [shape: f32[128,128], index: 4, kind: input, shape index: {}]
  %s5 = inlined_call_operand.vmem [shape: f32[128,128], index: 5, kind: input, shape index: {}]
  %s6 = inlined_call_operand.vmem [shape: f32[1,128], index: 6, kind: input, shape index: {}]
  %s7 = inlined_call_operand.vmem [shape: f32[128,128], index: 7, kind: input, shape index: {}]
  %s8 = inlined_call_operand.vmem [shape: f32[1,128], index: 8, kind: input, shape index: {}]
  %s9 = inlined_call_operand.vmem [shape: f32[64,128], index: 9, kind: output, shape index: {}]
  %s10 = sld [smem:[#allocation0]]
  $region46: #{rnn_model_forward.1} parent=0
    _
  %s12 = ssub.s32 1, %s10
  %s13 = scalar_select 0, %s12, %s10
  // Predicated region
  $region2: #{rnn_model_forward.1} parent=0 // pred_check
    _
  $region3: #{rnn_model_forward.1} parent=0 // pred_check_branch
    %15 = sbr.rel (0) target = $region5
  $region4: #{rnn_model_forward.1} parent=0 // pred_region
    _
  $region5: #{rnn_model_forward.1} parent=0 // pred_fallthru
    _
  // Predicated region
  $region6: #{rnn_model_forward.1} parent=0 // pred_check
    _
  $region7: #{rnn_model_forward.1} parent=0 // pred_check_branch
    %17 = sbr.rel (0) target = $region9
  $region8: #{rnn_model_forward.1} parent=0 // pred_region
    _
  $region9: #{rnn_model_forward.1} parent=0 // pred_fallthru
    _
  // Predicated region
  $region10: #{rnn_model_forward.1} parent=0 // pred_check
    _
  $region11: #{rnn_model_forward.1} parent=0 // pred_check_branch
    %19 = sbr.rel (0) target = $region13
  $region12: #{rnn_model_forward.1} parent=0 // pred_region
    _
  $region13: #{rnn_model_forward.1} parent=0 // pred_fallthru
    _
  // Predicated region
  $region14: #{rnn_model_forward.1} parent=0 // pred_check
    _
  $region15: #{rnn_model_forward.1} parent=0 // pred_check_branch
    %21 = sbr.rel (0) target = $region17
  $region16: #{rnn_model_forward.1} parent=0 // pred_region
    _
  $region17: #{rnn_model_forward.1} parent=0 // pred_fallthru
    _
  // Predicated region
  $region18: #{rnn_model_forward.1} parent=0 // pred_check
    _
  $region19: #{rnn_model_forward.1} parent=0 // pred_check_branch
    %23 = sbr.rel (0) target = $region21
  $region20: #{rnn_model_forward.1} parent=0 // pred_region
    _
  $region21: #{rnn_model_forward.1} parent=0 // pred_fallthru
    _
  // Predicated region
  $region22: #{rnn_model_forward.1} parent=0 // pred_check
    _
  $region23: #{rnn_model_forward.1} parent=0 // pred_check_branch
    %25 = sbr.rel (0) target = $region25
  $region24: #{rnn_model_forward.1} parent=0 // pred_region
    _
  $region25: #{rnn_model_forward.1} parent=0 // pred_fallthru
    _
  // Predicated region
  $region26: #{rnn_model_forward.1} parent=0 // pred_check
    _
  $region27: #{rnn_model_forward.1} parent=0 // pred_check_branch
    %27 = sbr.rel (0) target = $region29
  $region28: #{rnn_model_forward.1} parent=0 // pred_region
    _
  $region29: #{rnn_model_forward.1} parent=0 // pred_fallthru
    _
  // Predicated region
  $region30: #{rnn_model_forward.1} parent=0 // pred_check
    _
  $region31: #{rnn_model_forward.1} parent=0 // pred_check_branch
    %29 = sbr.rel (0) target = $region33
  $region32: #{rnn_model_forward.1} parent=0 // pred_region
    _
  $region33: #{rnn_model_forward.1} parent=0 // pred_fallthru
    _
  // Predicated region
  $region34: #{rnn_model_forward.1} parent=0 // pred_check
    _
  $region35: #{rnn_model_forward.1} parent=0 // pred_check_branch
    %31 = sbr.rel (0) target = $region37
  $region36: #{rnn_model_forward.1} parent=0 // pred_region
    _
  $region37: #{rnn_model_forward.1} parent=0 // pred_fallthru
    _
  %v32 = vld [vmem:[%s3] sm:$0x1]
  %v33 = vld [vmem:[%s0] sm:$0xff]
  %v34 = vld [vmem:[%s0 + $0x8] sm:$0xff]
  %v35 = vld [vmem:[%s0 + $0x10] sm:$0xff]
  %v36 = vld [vmem:[%s0 + $0x18] sm:$0xff]
  %v37 = vld [vmem:[%s0 + $0x20] sm:$0xff]
  %v38 = vld [vmem:[%s0 + $0x28] sm:$0xff]
  %v39 = vld [vmem:[%s0 + $0x30] sm:$0xff]
  %v40 = vld [vmem:[%s0 + $0x38] sm:$0xff]
  %v41 = vld [vmem:[%s1] sm:$0xff]
  %v42 = vld [vmem:[%s1 + $0x8] sm:$0xff]
  %v43 = vld [vmem:[%s1 + $0x10] sm:$0xff]
  %v44 = vld [vmem:[%s1 + $0x18] sm:$0xff]
  %v45 = vld [vmem:[%s1 + $0x20] sm:$0xff]
  %v46 = vld [vmem:[%s1 + $0x28] sm:$0xff]
  %v47 = vld [vmem:[%s1 + $0x30] sm:$0xff]
  %v48 = vld [vmem:[%s1 + $0x38] sm:$0xff]
  %v49 = vld [vmem:[%s1 + $0x40] sm:$0xff]
  %v50 = vld [vmem:[%s1 + $0x48] sm:$0xff]
  %v51 = vld [vmem:[%s1 + $0x50] sm:$0xff]
  %v52 = vld [vmem:[%s1 + $0x58] sm:$0xff]
  %v53 = vld [vmem:[%s1 + $0x60] sm:$0xff]
  %v54 = vld [vmem:[%s1 + $0x68] sm:$0xff]
  %v55 = vld [vmem:[%s1 + $0x70] sm:$0xff]
  %v56 = vld [vmem:[%s1 + $0x78] sm:$0xff]
  %v58 = vlaneseq
  %v59 = vshrl.u32 %v58, 7
  %v60 = vsub.s32 0, %v59
  %v61 = vrot.slane %v32, %v60
  %63 = vmatprep.subr.mxu0 0.0
  %64 = vmatpush1.msra.mxu0 %v41
  %65 = vmatprep.subr.mxu0 0.0
  %66 = vmatpush1.msra.mxu0 %v42
  %67 = vmatprep.subr.mxu0 0.0
  %68 = vmatpush1.msra.mxu0 %v43
  %69 = vmatprep.subr.mxu0 0.0
  %70 = vmatpush1.msra.mxu0 %v44
  %71 = vmatprep.subr.mxu0 0.0
  %72 = vmatpush1.msra.mxu0 %v45
  %73 = vmatprep.subr.mxu0 0.0
  %74 = vmatpush1.msra.mxu0 %v46
  %75 = vmatprep.subr.mxu0 0.0
  %76 = vmatpush1.msra.mxu0 %v47
  %77 = vmatprep.subr.mxu0 0.0
  %78 = vmatpush1.msra.mxu0 %v48
  %79 = vmatprep.subr.mxu0 0.0
  %80 = vmatpush1.msra.mxu0 %v49
  %81 = vmatprep.subr.mxu0 0.0
  %82 = vmatpush1.msra.mxu0 %v50
  %83 = vmatprep.subr.mxu0 0.0
  %84 = vmatpush1.msra.mxu0 %v51
  %85 = vmatprep.subr.mxu0 0.0
  %86 = vmatpush1.msra.mxu0 %v52
  %87 = vmatprep.subr.mxu0 0.0
  %88 = vmatpush1.msra.mxu0 %v53
  %89 = vmatprep.subr.mxu0 0.0
  %90 = vmatpush1.msra.mxu0 %v54
  %91 = vmatprep.subr.mxu0 0.0
  %92 = vmatpush1.msra.mxu0 %v55
  %93 = vmatprep.subr.mxu0 0.0
  %94 = vmatpush1.msra.mxu0 %v56
  %95 = vmatprep.subr.mxu0 0.0
  %96 = vmatpush1.msra.mxu0 0.0
  %97 = vmatprep.subr.mxu0 0.0
  %98 = vmatpush1.msra.mxu0 0.0
  %99 = vmatprep.subr.mxu0 0.0
  %100 = vmatpush1.msra.mxu0 0.0
  %101 = vmatprep.subr.mxu0 0.0
  %102 = vmatpush1.msra.mxu0 0.0
  %103 = vmatprep.subr.mxu0 0.0
  %104 = vmatpush1.msra.mxu0 0.0
  %105 = vmatprep.subr.mxu0 0.0
  %106 = vmatpush1.msra.mxu0 0.0
  %107 = vmatprep.subr.mxu0 0.0
  %108 = vmatpush1.msra.mxu0 0.0
  %109 = vmatprep.subr.mxu0 0.0
  %110 = vmatpush1.msra.mxu0 0.0
  %111 = vmatprep.subr.mxu0 0.0
  %112 = vmatpush1.msra.mxu0 0.0
  %113 = vmatprep.subr.mxu0 0.0
  %114 = vmatpush1.msra.mxu0 0.0
  %115 = vmatprep.subr.mxu0 0.0
  %116 = vmatpush1.msra.mxu0 0.0
  %117 = vmatprep.subr.mxu0 0.0
  %118 = vmatpush1.msra.mxu0 0.0
  %119 = vmatprep.subr.mxu0 0.0
  %120 = vmatpush1.msra.mxu0 0.0
  %121 = vmatprep.subr.mxu0 0.0
  %122 = vmatpush1.msra.mxu0 0.0
  %123 = vmatprep.subr.mxu0 0.0
  %124 = vmatpush1.msra.mxu0 0.0
  %125 = vmatprep.subr.mxu0 0.0
  %126 = vmatpush1.msra.mxu0 0.0
  %127 = vmatprep.mubr.f32.mxu0 0.0
  %128 = vmatmul.mubr.f32.gmra.mrb[0].mxu0 %v33
  %v129 = vpop.f32.mrb[0].mxu0
  %v130 = vadd.f32 %v61, %v129
  %v131 = vpop.f32.mrb[0].mxu0
  %132 = vmatprep.mubr.f32.mxu0 0.0
  %133 = vmatmul.mubr.f32.gmra.mrb[0].mxu0 %v34
  %v134 = vpop.f32.mrb[0].mxu0
  %v135 = vadd.f32 %v61, %v134
  %v136 = vpop.f32.mrb[0].mxu0
  %137 = vmatprep.mubr.f32.mxu0 0.0
  %138 = vmatmul.mubr.f32.gmra.mrb[0].mxu0 %v35
  %v139 = vpop.f32.mrb[0].mxu0
  %v140 = vadd.f32 %v61, %v139
  %v141 = vpop.f32.mrb[0].mxu0
  %142 = vmatprep.mubr.f32.mxu0 0.0
  %143 = vmatmul.mubr.f32.gmra.mrb[0].mxu0 %v36
  %v144 = vpop.f32.mrb[0].mxu0
  %v145 = vadd.f32 %v61, %v144
  %v146 = vpop.f32.mrb[0].mxu0
  %147 = vmatprep.mubr.f32.mxu0 0.0
  %148 = vmatmul.mubr.f32.gmra.mrb[0].mxu0 %v37
  %v149 = vpop.f32.mrb[0].mxu0
  %v150 = vadd.f32 %v61, %v149
  %v151 = vpop.f32.mrb[0].mxu0
  %152 = vmatprep.mubr.f32.mxu0 0.0
  %153 = vmatmul.mubr.f32.gmra.mrb[0].mxu0 %v38
  %v154 = vpop.f32.mrb[0].mxu0
  %v155 = vadd.f32 %v61, %v154
  %v156 = vpop.f32.mrb[0].mxu0
  %157 = vmatprep.mubr.f32.mxu0 0.0
  %158 = vmatmul.mubr.f32.gmra.mrb[0].mxu0 %v39
  %v159 = vpop.f32.mrb[0].mxu0
  %v160 = vadd.f32 %v61, %v159
  %v161 = vpop.f32.mrb[0].mxu0
  %162 = vmatprep.mubr.f32.mxu0 0.0
  %163 = vmatmul.mubr.f32.gmra.mrb[0].mxu0 %v40
  %v164 = vpop.f32.mrb[0].mxu0
  %v165 = vadd.f32 %v61, %v164
  %v166 = vpop.f32.mrb[0].mxu0
  %167 = vdwg.mxu0
  %168 = vst [vmem:[#allocation2] sm:$0xff] %v130
  %169 = vst [vmem:[#allocation2 + $0x8] sm:$0xff] %v135
  %170 = vst [vmem:[#allocation2 + $0x10] sm:$0xff] %v140
  %171 = vst [vmem:[#allocation2 + $0x18] sm:$0xff] %v145
  %172 = vst [vmem:[#allocation2 + $0x20] sm:$0xff] %v150
  %173 = vst [vmem:[#allocation2 + $0x28] sm:$0xff] %v155
  %174 = vst [vmem:[#allocation2 + $0x30] sm:$0xff] %v160
  %175 = vst [vmem:[#allocation2 + $0x38] sm:$0xff] %v165
  %v176 = vld [vmem:[#allocation2] sm:$0xff]
  %v177 = vld [vmem:[%s2] sm:$0xff]
  %v178 = vld [vmem:[%s2 + $0x8] sm:$0xff]
  %v179 = vld [vmem:[%s2 + $0x10] sm:$0xff]
  %v180 = vld [vmem:[%s2 + $0x18] sm:$0xff]
  %v181 = vld [vmem:[%s2 + $0x20] sm:$0xff]
  %v182 = vld [vmem:[%s2 + $0x28] sm:$0xff]
  %v183 = vld [vmem:[%s2 + $0x30] sm:$0xff]
  %v184 = vld [vmem:[%s2 + $0x38] sm:$0xff]
  %v185 = vld [vmem:[%s2 + $0x40] sm:$0xff]
  %v186 = vld [vmem:[%s2 + $0x48] sm:$0xff]
  %v187 = vld [vmem:[%s2 + $0x50] sm:$0xff]
  %v188 = vld [vmem:[%s2 + $0x58] sm:$0xff]
  %v189 = vld [vmem:[%s2 + $0x60] sm:$0xff]
  %v190 = vld [vmem:[%s2 + $0x68] sm:$0xff]
  %v191 = vld [vmem:[%s2 + $0x70] sm:$0xff]
  %v192 = vld [vmem:[%s2 + $0x78] sm:$0xff]
  %193 = vmatprep.subr.mxu0 0.0
  %194 = vmatpush1.msra.mxu0 %v177
  %195 = vmatprep.subr.mxu0 0.0
  %196 = vmatpush1.msra.mxu0 %v178
  %197 = vmatprep.subr.mxu0 0.0
  %198 = vmatpush1.msra.mxu0 %v179
  %199 = vmatprep.subr.mxu0 0.0
  %200 = vmatpush1.msra.mxu0 %v180
  %201 = vmatprep.subr.mxu0 0.0
  %202 = vmatpush1.msra.mxu0 %v181
  %203 = vmatprep.subr.mxu0 0.0
  %204 = vmatpush1.msra.mxu0 %v182
  %205 = vmatprep.subr.mxu0 0.0
  %206 = vmatpush1.msra.mxu0 %v183
  %207 = vmatprep.subr.mxu0 0.0
  %208 = vmatpush1.msra.mxu0 %v184
  %209 = vmatprep.subr.mxu0 0.0
  %210 = vmatpush1.msra.mxu0 %v185
  %211 = vmatprep.subr.mxu0 0.0
  %212 = vmatpush1.msra.mxu0 %v186
  %213 = vmatprep.subr.mxu0 0.0
  %214 = vmatpush1.msra.mxu0 %v187
  %215 = vmatprep.subr.mxu0 0.0
  %216 = vmatpush1.msra.mxu0 %v188
  %217 = vmatprep.subr.mxu0 0.0
  %218 = vmatpush1.msra.mxu0 %v189
  %219 = vmatprep.subr.mxu0 0.0
  %220 = vmatpush1.msra.mxu0 %v190
  %221 = vmatprep.subr.mxu0 0.0
  %222 = vmatpush1.msra.mxu0 %v191
  %223 = vmatprep.subr.mxu0 0.0
  %224 = vmatpush1.msra.mxu0 %v192
  %225 = vmatprep.subr.mxu0 0.0
  %226 = vmatpush1.msra.mxu0 0.0
  %227 = vmatprep.subr.mxu0 0.0
  %228 = vmatpush1.msra.mxu0 0.0
  %229 = vmatprep.subr.mxu0 0.0
  %230 = vmatpush1.msra.mxu0 0.0
  %231 = vmatprep.subr.mxu0 0.0
  %232 = vmatpush1.msra.mxu0 0.0
  %233 = vmatprep.subr.mxu0 0.0
  %234 = vmatpush1.msra.mxu0 0.0
  %235 = vmatprep.subr.mxu0 0.0
  %236 = vmatpush1.msra.mxu0 0.0
  %237 = vmatprep.subr.mxu0 0.0
  %238 = vmatpush1.msra.mxu0 0.0
  %239 = vmatprep.subr.mxu0 0.0
  %240 = vmatpush1.msra.mxu0 0.0
  %241 = vmatprep.subr.mxu0 0.0
  %242 = vmatpush1.msra.mxu0 0.0
  %243 = vmatprep.subr.mxu0 0.0
  %244 = vmatpush1.msra.mxu0 0.0
  %245 = vmatprep.subr.mxu0 0.0
  %246 = vmatpush1.msra.mxu0 0.0
  %247 = vmatprep.subr.mxu0 0.0
  %248 = vmatpush1.msra.mxu0 0.0
  %249 = vmatprep.subr.mxu0 0.0
  %250 = vmatpush1.msra.mxu0 0.0
  %251 = vmatprep.subr.mxu0 0.0
  %252 = vmatpush1.msra.mxu0 0.0
  %253 = vmatprep.subr.mxu0 0.0
  %254 = vmatpush1.msra.mxu0 0.0
  %255 = vmatprep.subr.mxu0 0.0
  %256 = vmatpush1.msra.mxu0 0.0
  %257 = vmatprep.mubr.f32.mxu0 0.0
  %258 = vmatmul.mubr.f32.gmra.mrb[0].mxu0 0.0
  %v259 = vpop.f32.mrb[0].mxu0
  %v260 = vadd.f32 0.0, %v259
  %v261 = vpop.f32.mrb[0].mxu0
  %262 = vdwg.mxu0
  %v263 = vadd.f32 %v176, %v260
  %v264 = vtanh.pop %v263
  %265 = vst [vmem:[#allocation2] sm:$0xff] %v264
  %v266 = vld [vmem:[#allocation2 + $0x8] sm:$0xff]
  %v267 = vld [vmem:[%s2] sm:$0xff]
  %v268 = vld [vmem:[%s2 + $0x8] sm:$0xff]
  %v269 = vld [vmem:[%s2 + $0x10] sm:$0xff]
  %v270 = vld [vmem:[%s2 + $0x18] sm:$0xff]
  %v271 = vld [vmem:[%s2 + $0x20] sm:$0xff]
  %v272 = vld [vmem:[%s2 + $0x28] sm:$0xff]
  %v273 = vld [vmem:[%s2 + $0x30] sm:$0xff]
  %v274 = vld [vmem:[%s2 + $0x38] sm:$0xff]
  %v275 = vld [vmem:[%s2 + $0x40] sm:$0xff]
  %v276 = vld [vmem:[%s2 + $0x48] sm:$0xff]
  %v277 = vld [vmem:[%s2 + $0x50] sm:$0xff]
  %v278 = vld [vmem:[%s2 + $0x58] sm:$0xff]
  %v279 = vld [vmem:[%s2 + $0x60] sm:$0xff]
  %v280 = vld [vmem:[%s2 + $0x68] sm:$0xff]
  %v281 = vld [vmem:[%s2 + $0x70] sm:$0xff]
  %v282 = vld [vmem:[%s2 + $0x78] sm:$0xff]
  %283 = vmatprep.subr.mxu0 0.0
  %284 = vmatpush1.msra.mxu0 %v267
  %285 = vmatprep.subr.mxu0 0.0
  %286 = vmatpush1.msra.mxu0 %v268
  %287 = vmatprep.subr.mxu0 0.0
  %288 = vmatpush1.msra.mxu0 %v269
  %289 = vmatprep.subr.mxu0 0.0
  %290 = vmatpush1.msra.mxu0 %v270
  %291 = vmatprep.subr.mxu0 0.0
  %292 = vmatpush1.msra.mxu0 %v271
  %293 = vmatprep.subr.mxu0 0.0
  %294 = vmatpush1.msra.mxu0 %v272
  %295 = vmatprep.subr.mxu0 0.0
  %296 = vmatpush1.msra.mxu0 %v273
  %297 = vmatprep.subr.mxu0 0.0
  %298 = vmatpush1.msra.mxu0 %v274
  %299 = vmatprep.subr.mxu0 0.0
  %300 = vmatpush1.msra.mxu0 %v275
  %301 = vmatprep.subr.mxu0 0.0
  %302 = vmatpush1.msra.mxu0 %v276
  %303 = vmatprep.subr.mxu0 0.0
  %304 = vmatpush1.msra.mxu0 %v277
  %305 = vmatprep.subr.mxu0 0.0
  %306 = vmatpush1.msra.mxu0 %v278
  %307 = vmatprep.subr.mxu0 0.0
  %308 = vmatpush1.msra.mxu0 %v279
  %309 = vmatprep.subr.mxu0 0.0
  %310 = vmatpush1.msra.mxu0 %v280
  %311 = vmatprep.subr.mxu0 0.0
  %312 = vmatpush1.msra.mxu0 %v281
  %313 = vmatprep.subr.mxu0 0.0
  %314 = vmatpush1.msra.mxu0 %v282
  %315 = vmatprep.subr.mxu0 0.0
  %316 = vmatpush1.msra.mxu0 0.0
  %317 = vmatprep.subr.mxu0 0.0
  %318 = vmatpush1.msra.mxu0 0.0
  %319 = vmatprep.subr.mxu0 0.0
  %320 = vmatpush1.msra.mxu0 0.0
  %321 = vmatprep.subr.mxu0 0.0
  %322 = vmatpush1.msra.mxu0 0.0
  %323 = vmatprep.subr.mxu0 0.0
  %324 = vmatpush1.msra.mxu0 0.0
  %325 = vmatprep.subr.mxu0 0.0
  %326 = vmatpush1.msra.mxu0 0.0
  %327 = vmatprep.subr.mxu0 0.0
  %328 = vmatpush1.msra.mxu0 0.0
  %329 = vmatprep.subr.mxu0 0.0
  %330 = vmatpush1.msra.mxu0 0.0
  %331 = vmatprep.subr.mxu0 0.0
  %332 = vmatpush1.msra.mxu0 0.0
  %333 = vmatprep.subr.mxu0 0.0
  %334 = vmatpush1.msra.mxu0 0.0
  %335 = vmatprep.subr.mxu0 0.0
  %336 = vmatpush1.msra.mxu0 0.0
  %337 = vmatprep.subr.mxu0 0.0
  %338 = vmatpush1.msra.mxu0 0.0
  %339 = vmatprep.subr.mxu0 0.0
  %340 = vmatpush1.msra.mxu0 0.0
  %341 = vmatprep.subr.mxu0 0.0
  %342 = vmatpush1.msra.mxu0 0.0
  %343 = vmatprep.subr.mxu0 0.0
  %344 = vmatpush1.msra.mxu0 0.0
  %345 = vmatprep.subr.mxu0 0.0
  %346 = vmatpush1.msra.mxu0 0.0
  %347 = vmatprep.mubr.f32.mxu0 0.0
  %348 = vmatmul.mubr.f32.gmra.mrb[0].mxu0 %v264
  %v349 = vpop.f32.mrb[0].mxu0
  %v350 = vadd.f32 0.0, %v349
  %v351 = vpop.f32.mrb[0].mxu0
  %352 = vdwg.mxu0
  %v353 = vadd.f32 %v266, %v350
  %v354 = vtanh.pop %v353
  %355 = vst [vmem:[#allocation2 + $0x8] sm:$0xff] %v354
  %v356 = vld [vmem:[#allocation2 + $0x10] sm:$0xff]
  %v357 = vld [vmem:[%s2] sm:$0xff]
  %v358 = vld [vmem:[%s2 + $0x8] sm:$0xff]
  %v359 = vld [vmem:[%s2 + $0x10] sm:$0xff]
  %v360 = vld [vmem:[%s2 + $0x18] sm:$0xff]
  %v361 = vld [vmem:[%s2 + $0x20] sm:$0xff]
  %v362 = vld [vmem:[%s2 + $0x28] sm:$0xff]
  %v363 = vld [vmem:[%s2 + $0x30] sm:$0xff]
  %v364 = vld [vmem:[%s2 + $0x38] sm:$0xff]
  %v365 = vld [vmem:[%s2 + $0x40] sm:$0xff]
  %v366 = vld [vmem:[%s2 + $0x48] sm:$0xff]
  %v367 = vld [vmem:[%s2 + $0x50] sm:$0xff]
  %v368 = vld [vmem:[%s2 + $0x58] sm:$0xff]
  %v369 = vld [vmem:[%s2 + $0x60] sm:$0xff]
  %v370 = vld [vmem:[%s2 + $0x68] sm:$0xff]
  %v371 = vld [vmem:[%s2 + $0x70] sm:$0xff]
  %v372 = vld [vmem:[%s2 + $0x78] sm:$0xff]
  %373 = vmatprep.subr.mxu0 0.0
  %374 = vmatpush1.msra.mxu0 %v357
  %375 = vmatprep.subr.mxu0 0.0
  %376 = vmatpush1.msra.mxu0 %v358
  %377 = vmatprep.subr.mxu0 0.0
  %378 = vmatpush1.msra.mxu0 %v359
  %379 = vmatprep.subr.mxu0 0.0
  %380 = vmatpush1.msra.mxu0 %v360
  %381 = vmatprep.subr.mxu0 0.0
  %382 = vmatpush1.msra.mxu0 %v361
  %383 = vmatprep.subr.mxu0 0.0
  %384 = vmatpush1.msra.mxu0 %v362
  %385 = vmatprep.subr.mxu0 0.0
  %386 = vmatpush1.msra.mxu0 %v363
  %387 = vmatprep.subr.mxu0 0.0
  %388 = vmatpush1.msra.mxu0 %v364
  %389 = vmatprep.subr.mxu0 0.0
  %390 = vmatpush1.msra.mxu0 %v365
  %391 = vmatprep.subr.mxu0 0.0
  %392 = vmatpush1.msra.mxu0 %v366
  %393 = vmatprep.subr.mxu0 0.0
  %394 = vmatpush1.msra.mxu0 %v367
  %395 = vmatprep.subr.mxu0 0.0
  %396 = vmatpush1.msra.mxu0 %v368
  %397 = vmatprep.subr.mxu0 0.0
  %398 = vmatpush1.msra.mxu0 %v369
  %399 = vmatprep.subr.mxu0 0.0
  %400 = vmatpush1.msra.mxu0 %v370
  %401 = vmatprep.subr.mxu0 0.0
  %402 = vmatpush1.msra.mxu0 %v371
  %403 = vmatprep.subr.mxu0 0.0
  %404 = vmatpush1.msra.mxu0 %v372
  %405 = vmatprep.subr.mxu0 0.0
  %406 = vmatpush1.msra.mxu0 0.0
  %407 = vmatprep.subr.mxu0 0.0
  %408 = vmatpush1.msra.mxu0 0.0
  %409 = vmatprep.subr.mxu0 0.0
  %410 = vmatpush1.msra.mxu0 0.0
  %411 = vmatprep.subr.mxu0 0.0
  %412 = vmatpush1.msra.mxu0 0.0
  %413 = vmatprep.subr.mxu0 0.0
  %414 = vmatpush1.msra.mxu0 0.0
  %415 = vmatprep.subr.mxu0 0.0
  %416 = vmatpush1.msra.mxu0 0.0
  %417 = vmatprep.subr.mxu0 0.0
  %418 = vmatpush1.msra.mxu0 0.0
  %419 = vmatprep.subr.mxu0 0.0
  %420 = vmatpush1.msra.mxu0 0.0
  %421 = vmatprep.subr.mxu0 0.0
  %422 = vmatpush1.msra.mxu0 0.0
  %423 = vmatprep.subr.mxu0 0.0
  %424 = vmatpush1.msra.mxu0 0.0
  %425 = vmatprep.subr.mxu0 0.0
  %426 = vmatpush1.msra.mxu0 0.0
  %427 = vmatprep.subr.mxu0 0.0
  %428 = vmatpush1.msra.mxu0 0.0
  %429 = vmatprep.subr.mxu0 0.0
  %430 = vmatpush1.msra.mxu0 0.0
  %431 = vmatprep.subr.mxu0 0.0
  %432 = vmatpush1.msra.mxu0 0.0
  %433 = vmatprep.subr.mxu0 0.0
  %434 = vmatpush1.msra.mxu0 0.0
  %435 = vmatprep.subr.mxu0 0.0
  %436 = vmatpush1.msra.mxu0 0.0
  %437 = vmatprep.mubr.f32.mxu0 0.0
  %438 = vmatmul.mubr.f32.gmra.mrb[0].mxu0 %v354
  %v439 = vpop.f32.mrb[0].mxu0
  %v440 = vadd.f32 0.0, %v439
  %v441 = vpop.f32.mrb[0].mxu0
  %442 = vdwg.mxu0
  %v443 = vadd.f32 %v356, %v440
  %v444 = vtanh.pop %v443
  %445 = vst [vmem:[#allocation2 + $0x10] sm:$0xff] %v444
  %v446 = vld [vmem:[#allocation2 + $0x18] sm:$0xff]
  %v447 = vld [vmem:[%s2] sm:$0xff]
  %v448 = vld [vmem:[%s2 + $0x8] sm:$0xff]
  %v449 = vld [vmem:[%s2 + $0x10] sm:$0xff]
  %v450 = vld [vmem:[%s2 + $0x18] sm:$0xff]
  %v451 = vld [vmem:[%s2 + $0x20] sm:$0xff]
  %v452 = vld [vmem:[%s2 + $0x28] sm:$0xff]
  %v453 = vld [vmem:[%s2 + $0x30] sm:$0xff]
  %v454 = vld [vmem:[%s2 + $0x38] sm:$0xff]
  %v455 = vld [vmem:[%s2 + $0x40] sm:$0xff]
  %v456 = vld [vmem:[%s2 + $0x48] sm:$0xff]
  %v457 = vld [vmem:[%s2 + $0x50] sm:$0xff]
  %v458 = vld [vmem:[%s2 + $0x58] sm:$0xff]
  %v459 = vld [vmem:[%s2 + $0x60] sm:$0xff]
  %v460 = vld [vmem:[%s2 + $0x68] sm:$0xff]
  %v461 = vld [vmem:[%s2 + $0x70] sm:$0xff]
  %v462 = vld [vmem:[%s2 + $0x78] sm:$0xff]
  %463 = vmatprep.subr.mxu0 0.0
  %464 = vmatpush1.msra.mxu0 %v447
  %465 = vmatprep.subr.mxu0 0.0
  %466 = vmatpush1.msra.mxu0 %v448
  %467 = vmatprep.subr.mxu0 0.0
  %468 = vmatpush1.msra.mxu0 %v449
  %469 = vmatprep.subr.mxu0 0.0
  %470 = vmatpush1.msra.mxu0 %v450
  %471 = vmatprep.subr.mxu0 0.0
  %472 = vmatpush1.msra.mxu0 %v451
  %473 = vmatprep.subr.mxu0 0.0
  %474 = vmatpush1.msra.mxu0 %v452
  %475 = vmatprep.subr.mxu0 0.0
  %476 = vmatpush1.msra.mxu0 %v453
  %477 = vmatprep.subr.mxu0 0.0
  %478 = vmatpush1.msra.mxu0 %v454
  %479 = vmatprep.subr.mxu0 0.0
  %480 = vmatpush1.msra.mxu0 %v455
  %481 = vmatprep.subr.mxu0 0.0
  %482 = vmatpush1.msra.mxu0 %v456
  %483 = vmatprep.subr.mxu0 0.0
  %484 = vmatpush1.msra.mxu0 %v457
  %485 = vmatprep.subr.mxu0 0.0
  %486 = vmatpush1.msra.mxu0 %v458
  %487 = vmatprep.subr.mxu0 0.0
  %488 = vmatpush1.msra.mxu0 %v459
  %489 = vmatprep.subr.mxu0 0.0
  %490 = vmatpush1.msra.mxu0 %v460
  %491 = vmatprep.subr.mxu0 0.0
  %492 = vmatpush1.msra.mxu0 %v461
  %493 = vmatprep.subr.mxu0 0.0
  %494 = vmatpush1.msra.mxu0 %v462
  %495 = vmatprep.subr.mxu0 0.0
  %496 = vmatpush1.msra.mxu0 0.0
  %497 = vmatprep.subr.mxu0 0.0
  %498 = vmatpush1.msra.mxu0 0.0
  %499 = vmatprep.subr.mxu0 0.0
  %500 = vmatpush1.msra.mxu0 0.0
  %501 = vmatprep.subr.mxu0 0.0
  %502 = vmatpush1.msra.mxu0 0.0
  %503 = vmatprep.subr.mxu0 0.0
  %504 = vmatpush1.msra.mxu0 0.0
  %505 = vmatprep.subr.mxu0 0.0
  %506 = vmatpush1.msra.mxu0 0.0
  %507 = vmatprep.subr.mxu0 0.0
  %508 = vmatpush1.msra.mxu0 0.0
  %509 = vmatprep.subr.mxu0 0.0
  %510 = vmatpush1.msra.mxu0 0.0
  %511 = vmatprep.subr.mxu0 0.0
  %512 = vmatpush1.msra.mxu0 0.0
  %513 = vmatprep.subr.mxu0 0.0
  %514 = vmatpush1.msra.mxu0 0.0
  %515 = vmatprep.subr.mxu0 0.0
  %516 = vmatpush1.msra.mxu0 0.0
  %517 = vmatprep.subr.mxu0 0.0
  %518 = vmatpush1.msra.mxu0 0.0
  %519 = vmatprep.subr.mxu0 0.0
  %520 = vmatpush1.msra.mxu0 0.0
  %521 = vmatprep.subr.mxu0 0.0
  %522 = vmatpush1.msra.mxu0 0.0
  %523 = vmatprep.subr.mxu0 0.0
  %524 = vmatpush1.msra.mxu0 0.0
  %525 = vmatprep.subr.mxu0 0.0
  %526 = vmatpush1.msra.mxu0 0.0
  %527 = vmatprep.mubr.f32.mxu0 0.0
  %528 = vmatmul.mubr.f32.gmra.mrb[0].mxu0 %v444
  %v529 = vpop.f32.mrb[0].mxu0
  %v530 = vadd.f32 0.0, %v529
  %v531 = vpop.f32.mrb[0].mxu0
  %532 = vdwg.mxu0
  %v533 = vadd.f32 %v446, %v530
  %v534 = vtanh.pop %v533
  %535 = vst [vmem:[#allocation2 + $0x18] sm:$0xff] %v534
  %v536 = vld [vmem:[#allocation2 + $0x20] sm:$0xff]
  %v537 = vld [vmem:[%s2] sm:$0xff]
  %v538 = vld [vmem:[%s2 + $0x8] sm:$0xff]
  %v539 = vld [vmem:[%s2 + $0x10] sm:$0xff]
  %v540 = vld [vmem:[%s2 + $0x18] sm:$0xff]
  %v541 = vld [vmem:[%s2 + $0x20] sm:$0xff]
  %v542 = vld [vmem:[%s2 + $0x28] sm:$0xff]
  %v543 = vld [vmem:[%s2 + $0x30] sm:$0xff]
  %v544 = vld [vmem:[%s2 + $0x38] sm:$0xff]
  %v545 = vld [vmem:[%s2 + $0x40] sm:$0xff]
  %v546 = vld [vmem:[%s2 + $0x48] sm:$0xff]
  %v547 = vld [vmem:[%s2 + $0x50] sm:$0xff]
  %v548 = vld [vmem:[%s2 + $0x58] sm:$0xff]
  %v549 = vld [vmem:[%s2 + $0x60] sm:$0xff]
  %v550 = vld [vmem:[%s2 + $0x68] sm:$0xff]
  %v551 = vld [vmem:[%s2 + $0x70] sm:$0xff]
  %v552 = vld [vmem:[%s2 + $0x78] sm:$0xff]
  %553 = vmatprep.subr.mxu0 0.0
  %554 = vmatpush1.msra.mxu0 %v537
  %555 = vmatprep.subr.mxu0 0.0
  %556 = vmatpush1.msra.mxu0 %v538
  %557 = vmatprep.subr.mxu0 0.0
  %558 = vmatpush1.msra.mxu0 %v539
  %559 = vmatprep.subr.mxu0 0.0
  %560 = vmatpush1.msra.mxu0 %v540
  %561 = vmatprep.subr.mxu0 0.0
  %562 = vmatpush1.msra.mxu0 %v541
  %563 = vmatprep.subr.mxu0 0.0
  %564 = vmatpush1.msra.mxu0 %v542
  %565 = vmatprep.subr.mxu0 0.0
  %566 = vmatpush1.msra.mxu0 %v543
  %567 = vmatprep.subr.mxu0 0.0
  %568 = vmatpush1.msra.mxu0 %v544
  %569 = vmatprep.subr.mxu0 0.0
  %570 = vmatpush1.msra.mxu0 %v545
  %571 = vmatprep.subr.mxu0 0.0
  %572 = vmatpush1.msra.mxu0 %v546
  %573 = vmatprep.subr.mxu0 0.0
  %574 = vmatpush1.msra.mxu0 %v547
  %575 = vmatprep.subr.mxu0 0.0
  %576 = vmatpush1.msra.mxu0 %v548
  %577 = vmatprep.subr.mxu0 0.0
  %578 = vmatpush1.msra.mxu0 %v549
  %579 = vmatprep.subr.mxu0 0.0
  %580 = vmatpush1.msra.mxu0 %v550
  %581 = vmatprep.subr.mxu0 0.0
  %582 = vmatpush1.msra.mxu0 %v551
  %583 = vmatprep.subr.mxu0 0.0
  %584 = vmatpush1.msra.mxu0 %v552
  %585 = vmatprep.subr.mxu0 0.0
  %586 = vmatpush1.msra.mxu0 0.0
  %587 = vmatprep.subr.mxu0 0.0
  %588 = vmatpush1.msra.mxu0 0.0
  %589 = vmatprep.subr.mxu0 0.0
  %590 = vmatpush1.msra.mxu0 0.0
  %591 = vmatprep.subr.mxu0 0.0
  %592 = vmatpush1.msra.mxu0 0.0
  %593 = vmatprep.subr.mxu0 0.0
  %594 = vmatpush1.msra.mxu0 0.0
  %595 = vmatprep.subr.mxu0 0.0
  %596 = vmatpush1.msra.mxu0 0.0
  %597 = vmatprep.subr.mxu0 0.0
  %598 = vmatpush1.msra.mxu0 0.0
  %599 = vmatprep.subr.mxu0 0.0
  %600 = vmatpush1.msra.mxu0 0.0
  %601 = vmatprep.subr.mxu0 0.0
  %602 = vmatpush1.msra.mxu0 0.0
  %603 = vmatprep.subr.mxu0 0.0
  %604 = vmatpush1.msra.mxu0 0.0
  %605 = vmatprep.subr.mxu0 0.0
  %606 = vmatpush1.msra.mxu0 0.0
  %607 = vmatprep.subr.mxu0 0.0
  %608 = vmatpush1.msra.mxu0 0.0
  %609 = vmatprep.subr.mxu0 0.0
  %610 = vmatpush1.msra.mxu0 0.0
  %611 = vmatprep.subr.mxu0 0.0
  %612 = vmatpush1.msra.mxu0 0.0
  %613 = vmatprep.subr.mxu0 0.0
  %614 = vmatpush1.msra.mxu0 0.0
  %615 = vmatprep.subr.mxu0 0.0
  %616 = vmatpush1.msra.mxu0 0.0
  %617 = vmatprep.mubr.f32.mxu0 0.0
  %618 = vmatmul.mubr.f32.gmra.mrb[0].mxu0 %v534
  %v619 = vpop.f32.mrb[0].mxu0
  %v620 = vadd.f32 0.0, %v619
  %v621 = vpop.f32.mrb[0].mxu0
  %622 = vdwg.mxu0
  %v623 = vadd.f32 %v536, %v620
  %v624 = vtanh.pop %v623
  %625 = vst [vmem:[#allocation2 + $0x20] sm:$0xff] %v624
  %v626 = vld [vmem:[#allocation2 + $0x28] sm:$0xff]
  %v627 = vld [vmem:[%s2] sm:$0xff]
  %v628 = vld [vmem:[%s2 + $0x8] sm:$0xff]
  %v629 = vld [vmem:[%s2 + $0x10] sm:$0xff]
  %v630 = vld [vmem:[%s2 + $0x18] sm:$0xff]
  %v631 = vld [vmem:[%s2 + $0x20] sm:$0xff]
  %v632 = vld [vmem:[%s2 + $0x28] sm:$0xff]
  %v633 = vld [vmem:[%s2 + $0x30] sm:$0xff]
  %v634 = vld [vmem:[%s2 + $0x38] sm:$0xff]
  %v635 = vld [vmem:[%s2 + $0x40] sm:$0xff]
  %v636 = vld [vmem:[%s2 + $0x48] sm:$0xff]
  %v637 = vld [vmem:[%s2 + $0x50] sm:$0xff]
  %v638 = vld [vmem:[%s2 + $0x58] sm:$0xff]
  %v639 = vld [vmem:[%s2 + $0x60] sm:$0xff]
  %v640 = vld [vmem:[%s2 + $0x68] sm:$0xff]
  %v641 = vld [vmem:[%s2 + $0x70] sm:$0xff]
  %v642 = vld [vmem:[%s2 + $0x78] sm:$0xff]
  %643 = vmatprep.subr.mxu0 0.0
  %644 = vmatpush1.msra.mxu0 %v627
  %645 = vmatprep.subr.mxu0 0.0
  %646 = vmatpush1.msra.mxu0 %v628
  %647 = vmatprep.subr.mxu0 0.0
  %648 = vmatpush1.msra.mxu0 %v629
  %649 = vmatprep.subr.mxu0 0.0
  %650 = vmatpush1.msra.mxu0 %v630
  %651 = vmatprep.subr.mxu0 0.0
  %652 = vmatpush1.msra.mxu0 %v631
  %653 = vmatprep.subr.mxu0 0.0
  %654 = vmatpush1.msra.mxu0 %v632
  %655 = vmatprep.subr.mxu0 0.0
  %656 = vmatpush1.msra.mxu0 %v633
  %657 = vmatprep.subr.mxu0 0.0
  %658 = vmatpush1.msra.mxu0 %v634
  %659 = vmatprep.subr.mxu0 0.0
  %660 = vmatpush1.msra.mxu0 %v635
  %661 = vmatprep.subr.mxu0 0.0
  %662 = vmatpush1.msra.mxu0 %v636
  %663 = vmatprep.subr.mxu0 0.0
  %664 = vmatpush1.msra.mxu0 %v637
  %665 = vmatprep.subr.mxu0 0.0
  %666 = vmatpush1.msra.mxu0 %v638
  %667 = vmatprep.subr.mxu0 0.0
  %668 = vmatpush1.msra.mxu0 %v639
  %669 = vmatprep.subr.mxu0 0.0
  %670 = vmatpush1.msra.mxu0 %v640
  %671 = vmatprep.subr.mxu0 0.0
  %672 = vmatpush1.msra.mxu0 %v641
  %673 = vmatprep.subr.mxu0 0.0
  %674 = vmatpush1.msra.mxu0 %v642
  %675 = vmatprep.subr.mxu0 0.0
  %676 = vmatpush1.msra.mxu0 0.0
  %677 = vmatprep.subr.mxu0 0.0
  %678 = vmatpush1.msra.mxu0 0.0
  %679 = vmatprep.subr.mxu0 0.0
  %680 = vmatpush1.msra.mxu0 0.0
  %681 = vmatprep.subr.mxu0 0.0
  %682 = vmatpush1.msra.mxu0 0.0
  %683 = vmatprep.subr.mxu0 0.0
  %684 = vmatpush1.msra.mxu0 0.0
  %685 = vmatprep.subr.mxu0 0.0
  %686 = vmatpush1.msra.mxu0 0.0
  %687 = vmatprep.subr.mxu0 0.0
  %688 = vmatpush1.msra.mxu0 0.0
  %689 = vmatprep.subr.mxu0 0.0
  %690 = vmatpush1.msra.mxu0 0.0
  %691 = vmatprep.subr.mxu0 0.0
  %692 = vmatpush1.msra.mxu0 0.0
  %693 = vmatprep.subr.mxu0 0.0
  %694 = vmatpush1.msra.mxu0 0.0
  %695 = vmatprep.subr.mxu0 0.0
  %696 = vmatpush1.msra.mxu0 0.0
  %697 = vmatprep.subr.mxu0 0.0
  %698 = vmatpush1.msra.mxu0 0.0
  %699 = vmatprep.subr.mxu0 0.0
  %700 = vmatpush1.msra.mxu0 0.0
  %701 = vmatprep.subr.mxu0 0.0
  %702 = vmatpush1.msra.mxu0 0.0
  %703 = vmatprep.subr.mxu0 0.0
  %704 = vmatpush1.msra.mxu0 0.0
  %705 = vmatprep.subr.mxu0 0.0
  %706 = vmatpush1.msra.mxu0 0.0
  %707 = vmatprep.mubr.f32.mxu0 0.0
  %708 = vmatmul.mubr.f32.gmra.mrb[0].mxu0 %v624
  %v709 = vpop.f32.mrb[0].mxu0
  %v710 = vadd.f32 0.0, %v709
  %v711 = vpop.f32.mrb[0].mxu0
  %712 = vdwg.mxu0
  %v713 = vadd.f32 %v626, %v710
  %v714 = vtanh.pop %v713
  %715 = vst [vmem:[#allocation2 + $0x28] sm:$0xff] %v714
  %v716 = vld [vmem:[#allocation2 + $0x30] sm:$0xff]
  %v717 = vld [vmem:[%s2] sm:$0xff]
  %v718 = vld [vmem:[%s2 + $0x8] sm:$0xff]
  %v719 = vld [vmem:[%s2 + $0x10] sm:$0xff]
  %v720 = vld [vmem:[%s2 + $0x18] sm:$0xff]
  %v721 = vld [vmem:[%s2 + $0x20] sm:$0xff]
  %v722 = vld [vmem:[%s2 + $0x28] sm:$0xff]
  %v723 = vld [vmem:[%s2 + $0x30] sm:$0xff]
  %v724 = vld [vmem:[%s2 + $0x38] sm:$0xff]
  %v725 = vld [vmem:[%s2 + $0x40] sm:$0xff]
  %v726 = vld [vmem:[%s2 + $0x48] sm:$0xff]
  %v727 = vld [vmem:[%s2 + $0x50] sm:$0xff]
  %v728 = vld [vmem:[%s2 + $0x58] sm:$0xff]
  %v729 = vld [vmem:[%s2 + $0x60] sm:$0xff]
  %v730 = vld [vmem:[%s2 + $0x68] sm:$0xff]
  %v731 = vld [vmem:[%s2 + $0x70] sm:$0xff]
  %v732 = vld [vmem:[%s2 + $0x78] sm:$0xff]
  %733 = vmatprep.subr.mxu0 0.0
  %734 = vmatpush1.msra.mxu0 %v717
  %735 = vmatprep.subr.mxu0 0.0
  %736 = vmatpush1.msra.mxu0 %v718
  %737 = vmatprep.subr.mxu0 0.0
  %738 = vmatpush1.msra.mxu0 %v719
  %739 = vmatprep.subr.mxu0 0.0
  %740 = vmatpush1.msra.mxu0 %v720
  %741 = vmatprep.subr.mxu0 0.0
  %742 = vmatpush1.msra.mxu0 %v721
  %743 = vmatprep.subr.mxu0 0.0
  %744 = vmatpush1.msra.mxu0 %v722
  %745 = vmatprep.subr.mxu0 0.0
  %746 = vmatpush1.msra.mxu0 %v723
  %747 = vmatprep.subr.mxu0 0.0
  %748 = vmatpush1.msra.mxu0 %v724
  %749 = vmatprep.subr.mxu0 0.0
  %750 = vmatpush1.msra.mxu0 %v725
  %751 = vmatprep.subr.mxu0 0.0
  %752 = vmatpush1.msra.mxu0 %v726
  %753 = vmatprep.subr.mxu0 0.0
  %754 = vmatpush1.msra.mxu0 %v727
  %755 = vmatprep.subr.mxu0 0.0
  %756 = vmatpush1.msra.mxu0 %v728
  %757 = vmatprep.subr.mxu0 0.0
  %758 = vmatpush1.msra.mxu0 %v729
  %759 = vmatprep.subr.mxu0 0.0
  %760 = vmatpush1.msra.mxu0 %v730
  %761 = vmatprep.subr.mxu0 0.0
  %762 = vmatpush1.msra.mxu0 %v731
  %763 = vmatprep.subr.mxu0 0.0
  %764 = vmatpush1.msra.mxu0 %v732
  %765 = vmatprep.subr.mxu0 0.0
  %766 = vmatpush1.msra.mxu0 0.0
  %767 = vmatprep.subr.mxu0 0.0
  %768 = vmatpush1.msra.mxu0 0.0
  %769 = vmatprep.subr.mxu0 0.0
  %770 = vmatpush1.msra.mxu0 0.0
  %771 = vmatprep.subr.mxu0 0.0
  %772 = vmatpush1.msra.mxu0 0.0
  %773 = vmatprep.subr.mxu0 0.0
  %774 = vmatpush1.msra.mxu0 0.0
  %775 = vmatprep.subr.mxu0 0.0
  %776 = vmatpush1.msra.mxu0 0.0
  %777 = vmatprep.subr.mxu0 0.0
  %778 = vmatpush1.msra.mxu0 0.0
  %779 = vmatprep.subr.mxu0 0.0
  %780 = vmatpush1.msra.mxu0 0.0
  %781 = vmatprep.subr.mxu0 0.0
  %782 = vmatpush1.msra.mxu0 0.0
  %783 = vmatprep.subr.mxu0 0.0
  %784 = vmatpush1.msra.mxu0 0.0
  %785 = vmatprep.subr.mxu0 0.0
  %786 = vmatpush1.msra.mxu0 0.0
  %787 = vmatprep.subr.mxu0 0.0
  %788 = vmatpush1.msra.mxu0 0.0
  %789 = vmatprep.subr.mxu0 0.0
  %790 = vmatpush1.msra.mxu0 0.0
  %791 = vmatprep.subr.mxu0 0.0
  %792 = vmatpush1.msra.mxu0 0.0
  %793 = vmatprep.subr.mxu0 0.0
  %794 = vmatpush1.msra.mxu0 0.0
  %795 = vmatprep.subr.mxu0 0.0
  %796 = vmatpush1.msra.mxu0 0.0
  %797 = vmatprep.mubr.f32.mxu0 0.0
  %798 = vmatmul.mubr.f32.gmra.mrb[0].mxu0 %v714
  %v799 = vpop.f32.mrb[0].mxu0
  %v800 = vadd.f32 0.0, %v799
  %v801 = vpop.f32.mrb[0].mxu0
  %802 = vdwg.mxu0
  %v803 = vadd.f32 %v716, %v800
  %v804 = vtanh.pop %v803
  %805 = vst [vmem:[#allocation2 + $0x30] sm:$0xff] %v804
  %v806 = vld [vmem:[#allocation2 + $0x38] sm:$0xff]
  %v807 = vld [vmem:[%s2] sm:$0xff]
  %v808 = vld [vmem:[%s2 + $0x8] sm:$0xff]
  %v809 = vld [vmem:[%s2 + $0x10] sm:$0xff]
  %v810 = vld [vmem:[%s2 + $0x18] sm:$0xff]
  %v811 = vld [vmem:[%s2 + $0x20] sm:$0xff]
  %v812 = vld [vmem:[%s2 + $0x28] sm:$0xff]
  %v813 = vld [vmem:[%s2 + $0x30] sm:$0xff]
  %v814 = vld [vmem:[%s2 + $0x38] sm:$0xff]
  %v815 = vld [vmem:[%s2 + $0x40] sm:$0xff]
  %v816 = vld [vmem:[%s2 + $0x48] sm:$0xff]
  %v817 = vld [vmem:[%s2 + $0x50] sm:$0xff]
  %v818 = vld [vmem:[%s2 + $0x58] sm:$0xff]
  %v819 = vld [vmem:[%s2 + $0x60] sm:$0xff]
  %v820 = vld [vmem:[%s2 + $0x68] sm:$0xff]
  %v821 = vld [vmem:[%s2 + $0x70] sm:$0xff]
  %v822 = vld [vmem:[%s2 + $0x78] sm:$0xff]
  %823 = vmatprep.subr.mxu0 0.0
  %824 = vmatpush1.msra.mxu0 %v807
  %825 = vmatprep.subr.mxu0 0.0
  %826 = vmatpush1.msra.mxu0 %v808
  %827 = vmatprep.subr.mxu0 0.0
  %828 = vmatpush1.msra.mxu0 %v809
  %829 = vmatprep.subr.mxu0 0.0
  %830 = vmatpush1.msra.mxu0 %v810
  %831 = vmatprep.subr.mxu0 0.0
  %832 = vmatpush1.msra.mxu0 %v811
  %833 = vmatprep.subr.mxu0 0.0
  %834 = vmatpush1.msra.mxu0 %v812
  %835 = vmatprep.subr.mxu0 0.0
  %836 = vmatpush1.msra.mxu0 %v813
  %837 = vmatprep.subr.mxu0 0.0
  %838 = vmatpush1.msra.mxu0 %v814
  %839 = vmatprep.subr.mxu0 0.0
  %840 = vmatpush1.msra.mxu0 %v815
  %841 = vmatprep.subr.mxu0 0.0
  %842 = vmatpush1.msra.mxu0 %v816
  %843 = vmatprep.subr.mxu0 0.0
  %844 = vmatpush1.msra.mxu0 %v817
  %845 = vmatprep.subr.mxu0 0.0
  %846 = vmatpush1.msra.mxu0 %v818
  %847 = vmatprep.subr.mxu0 0.0
  %848 = vmatpush1.msra.mxu0 %v819
  %849 = vmatprep.subr.mxu0 0.0
  %850 = vmatpush1.msra.mxu0 %v820
  %851 = vmatprep.subr.mxu0 0.0
  %852 = vmatpush1.msra.mxu0 %v821
  %853 = vmatprep.subr.mxu0 0.0
  %854 = vmatpush1.msra.mxu0 %v822
  %855 = vmatprep.subr.mxu0 0.0
  %856 = vmatpush1.msra.mxu0 0.0
  %857 = vmatprep.subr.mxu0 0.0
  %858 = vmatpush1.msra.mxu0 0.0
  %859 = vmatprep.subr.mxu0 0.0
  %860 = vmatpush1.msra.mxu0 0.0
  %861 = vmatprep.subr.mxu0 0.0
  %862 = vmatpush1.msra.mxu0 0.0
  %863 = vmatprep.subr.mxu0 0.0
  %864 = vmatpush1.msra.mxu0 0.0
  %865 = vmatprep.subr.mxu0 0.0
  %866 = vmatpush1.msra.mxu0 0.0
  %867 = vmatprep.subr.mxu0 0.0
  %868 = vmatpush1.msra.mxu0 0.0
  %869 = vmatprep.subr.mxu0 0.0
  %870 = vmatpush1.msra.mxu0 0.0
  %871 = vmatprep.subr.mxu0 0.0
  %872 = vmatpush1.msra.mxu0 0.0
  %873 = vmatprep.subr.mxu0 0.0
  %874 = vmatpush1.msra.mxu0 0.0
  %875 = vmatprep.subr.mxu0 0.0
  %876 = vmatpush1.msra.mxu0 0.0
  %877 = vmatprep.subr.mxu0 0.0
  %878 = vmatpush1.msra.mxu0 0.0
  %879 = vmatprep.subr.mxu0 0.0
  %880 = vmatpush1.msra.mxu0 0.0
  %881 = vmatprep.subr.mxu0 0.0
  %882 = vmatpush1.msra.mxu0 0.0
  %883 = vmatprep.subr.mxu0 0.0
  %884 = vmatpush1.msra.mxu0 0.0
  %885 = vmatprep.subr.mxu0 0.0
  %886 = vmatpush1.msra.mxu0 0.0
  %887 = vmatprep.mubr.f32.mxu0 0.0
  %888 = vmatmul.mubr.f32.gmra.mrb[0].mxu0 %v804
  %v889 = vpop.f32.mrb[0].mxu0
  %v890 = vadd.f32 0.0, %v889
  %v891 = vpop.f32.mrb[0].mxu0
  %892 = vdwg.mxu0
  %v893 = vadd.f32 %v806, %v890
  %v894 = vtanh.pop %v893
  %895 = vst [vmem:[#allocation2 + $0x38] sm:$0xff] %v894
  %v896 = vld [vmem:[%s6] sm:$0x1]
  %v897 = vld [vmem:[#allocation2] sm:$0xff]
  %v898 = vld [vmem:[#allocation2 + $0x8] sm:$0xff]
  %v899 = vld [vmem:[#allocation2 + $0x10] sm:$0xff]
  %v900 = vld [vmem:[#allocation2 + $0x18] sm:$0xff]
  %v901 = vld [vmem:[#allocation2 + $0x20] sm:$0xff]
  %v902 = vld [vmem:[#allocation2 + $0x28] sm:$0xff]
  %v903 = vld [vmem:[#allocation2 + $0x30] sm:$0xff]
  %v904 = vld [vmem:[#allocation2 + $0x38] sm:$0xff]
  %v905 = vld [vmem:[%s4] sm:$0xff]
  %v906 = vld [vmem:[%s4 + $0x8] sm:$0xff]
  %v907 = vld [vmem:[%s4 + $0x10] sm:$0xff]
  %v908 = vld [vmem:[%s4 + $0x18] sm:$0xff]
  %v909 = vld [vmem:[%s4 + $0x20] sm:$0xff]
  %v910 = vld [vmem:[%s4 + $0x28] sm:$0xff]
  %v911 = vld [vmem:[%s4 + $0x30] sm:$0xff]
  %v912 = vld [vmem:[%s4 + $0x38] sm:$0xff]
  %v913 = vld [vmem:[%s4 + $0x40] sm:$0xff]
  %v914 = vld [vmem:[%s4 + $0x48] sm:$0xff]
  %v915 = vld [vmem:[%s4 + $0x50] sm:$0xff]
  %v916 = vld [vmem:[%s4 + $0x58] sm:$0xff]
  %v917 = vld [vmem:[%s4 + $0x60] sm:$0xff]
  %v918 = vld [vmem:[%s4 + $0x68] sm:$0xff]
  %v919 = vld [vmem:[%s4 + $0x70] sm:$0xff]
  %v920 = vld [vmem:[%s4 + $0x78] sm:$0xff]
  %v922 = vlaneseq
  %v923 = vshrl.u32 %v922, 7
  %v924 = vsub.s32 0, %v923
  %v925 = vrot.slane %v896, %v924
  %927 = vmatprep.subr.mxu0 0.0
  %928 = vmatpush1.msra.mxu0 %v905
  %929 = vmatprep.subr.mxu0 0.0
  %930 = vmatpush1.msra.mxu0 %v906
  %931 = vmatprep.subr.mxu0 0.0
  %932 = vmatpush1.msra.mxu0 %v907
  %933 = vmatprep.subr.mxu0 0.0
  %934 = vmatpush1.msra.mxu0 %v908
  %935 = vmatprep.subr.mxu0 0.0
  %936 = vmatpush1.msra.mxu0 %v909
  %937 = vmatprep.subr.mxu0 0.0
  %938 = vmatpush1.msra.mxu0 %v910
  %939 = vmatprep.subr.mxu0 0.0
  %940 = vmatpush1.msra.mxu0 %v911
  %941 = vmatprep.subr.mxu0 0.0
  %942 = vmatpush1.msra.mxu0 %v912
  %943 = vmatprep.subr.mxu0 0.0
  %944 = vmatpush1.msra.mxu0 %v913
  %945 = vmatprep.subr.mxu0 0.0
  %946 = vmatpush1.msra.mxu0 %v914
  %947 = vmatprep.subr.mxu0 0.0
  %948 = vmatpush1.msra.mxu0 %v915
  %949 = vmatprep.subr.mxu0 0.0
  %950 = vmatpush1.msra.mxu0 %v916
  %951 = vmatprep.subr.mxu0 0.0
  %952 = vmatpush1.msra.mxu0 %v917
  %953 = vmatprep.subr.mxu0 0.0
  %954 = vmatpush1.msra.mxu0 %v918
  %955 = vmatprep.subr.mxu0 0.0
  %956 = vmatpush1.msra.mxu0 %v919
  %957 = vmatprep.subr.mxu0 0.0
  %958 = vmatpush1.msra.mxu0 %v920
  %959 = vmatprep.subr.mxu0 0.0
  %960 = vmatpush1.msra.mxu0 0.0
  %961 = vmatprep.subr.mxu0 0.0
  %962 = vmatpush1.msra.mxu0 0.0
  %963 = vmatprep.subr.mxu0 0.0
  %964 = vmatpush1.msra.mxu0 0.0
  %965 = vmatprep.subr.mxu0 0.0
  %966 = vmatpush1.msra.mxu0 0.0
  %967 = vmatprep.subr.mxu0 0.0
  %968 = vmatpush1.msra.mxu0 0.0
  %969 = vmatprep.subr.mxu0 0.0
  %970 = vmatpush1.msra.mxu0 0.0
  %971 = vmatprep.subr.mxu0 0.0
  %972 = vmatpush1.msra.mxu0 0.0
  %973 = vmatprep.subr.mxu0 0.0
  %974 = vmatpush1.msra.mxu0 0.0
  %975 = vmatprep.subr.mxu0 0.0
  %976 = vmatpush1.msra.mxu0 0.0
  %977 = vmatprep.subr.mxu0 0.0
  %978 = vmatpush1.msra.mxu0 0.0
  %979 = vmatprep.subr.mxu0 0.0
  %980 = vmatpush1.msra.mxu0 0.0
  %981 = vmatprep.subr.mxu0 0.0
  %982 = vmatpush1.msra.mxu0 0.0
  %983 = vmatprep.subr.mxu0 0.0
  %984 = vmatpush1.msra.mxu0 0.0
  %985 = vmatprep.subr.mxu0 0.0
  %986 = vmatpush1.msra.mxu0 0.0
  %987 = vmatprep.subr.mxu0 0.0
  %988 = vmatpush1.msra.mxu0 0.0
  %989 = vmatprep.subr.mxu0 0.0
  %990 = vmatpush1.msra.mxu0 0.0
  %991 = vmatprep.mubr.f32.mxu0 0.0
  %992 = vmatmul.mubr.f32.gmra.mrb[0].mxu0 %v897
  %v993 = vpop.f32.mrb[0].mxu0
  %v994 = vadd.f32 %v925, %v993
  %v995 = vpop.f32.mrb[0].mxu0
  %996 = vmatprep.mubr.f32.mxu0 0.0
  %997 = vmatmul.mubr.f32.gmra.mrb[0].mxu0 %v898
  %v998 = vpop.f32.mrb[0].mxu0
  %v999 = vadd.f32 %v925, %v998
  %v1000 = vpop.f32.mrb[0].mxu0
  %1001 = vmatprep.mubr.f32.mxu0 0.0
  %1002 = vmatmul.mubr.f32.gmra.mrb[0].mxu0 %v899
  %v1003 = vpop.f32.mrb[0].mxu0
  %v1004 = vadd.f32 %v925, %v1003
  %v1005 = vpop.f32.mrb[0].mxu0
  %1006 = vmatprep.mubr.f32.mxu0 0.0
  %1007 = vmatmul.mubr.f32.gmra.mrb[0].mxu0 %v900
  %v1008 = vpop.f32.mrb[0].mxu0
  %v1009 = vadd.f32 %v925, %v1008
  %v1010 = vpop.f32.mrb[0].mxu0
  %1011 = vmatprep.mubr.f32.mxu0 0.0
  %1012 = vmatmul.mubr.f32.gmra.mrb[0].mxu0 %v901
  %v1013 = vpop.f32.mrb[0].mxu0
  %v1014 = vadd.f32 %v925, %v1013
  %v1015 = vpop.f32.mrb[0].mxu0
  %1016 = vmatprep.mubr.f32.mxu0 0.0
  %1017 = vmatmul.mubr.f32.gmra.mrb[0].mxu0 %v902
  %v1018 = vpop.f32.mrb[0].mxu0
  %v1019 = vadd.f32 %v925, %v1018
  %v1020 = vpop.f32.mrb[0].mxu0
  %1021 = vmatprep.mubr.f32.mxu0 0.0
  %1022 = vmatmul.mubr.f32.gmra.mrb[0].mxu0 %v903
  %v1023 = vpop.f32.mrb[0].mxu0
  %v1024 = vadd.f32 %v925, %v1023
  %v1025 = vpop.f32.mrb[0].mxu0
  %1026 = vmatprep.mubr.f32.mxu0 0.0
  %1027 = vmatmul.mubr.f32.gmra.mrb[0].mxu0 %v904
  %v1028 = vpop.f32.mrb[0].mxu0
  %v1029 = vadd.f32 %v925, %v1028
  %v1030 = vpop.f32.mrb[0].mxu0
  %1031 = vdwg.mxu0
  %1032 = vst [vmem:[#allocation2] sm:$0xff] %v994
  %1033 = vst [vmem:[#allocation2 + $0x8] sm:$0xff] %v999
  %1034 = vst [vmem:[#allocation2 + $0x10] sm:$0xff] %v1004
  %1035 = vst [vmem:[#allocation2 + $0x18] sm:$0xff] %v1009
  %1036 = vst [vmem:[#allocation2 + $0x20] sm:$0xff] %v1014
  %1037 = vst [vmem:[#allocation2 + $0x28] sm:$0xff] %v1019
  %1038 = vst [vmem:[#allocation2 + $0x30] sm:$0xff] %v1024
  %1039 = vst [vmem:[#allocation2 + $0x38] sm:$0xff] %v1029
  %v1040 = vld [vmem:[#allocation2] sm:$0xff]
  %v1041 = vld [vmem:[%s5] sm:$0xff]
  %v1042 = vld [vmem:[%s5 + $0x8] sm:$0xff]
  %v1043 = vld [vmem:[%s5 + $0x10] sm:$0xff]
  %v1044 = vld [vmem:[%s5 + $0x18] sm:$0xff]
  %v1045 = vld [vmem:[%s5 + $0x20] sm:$0xff]
  %v1046 = vld [vmem:[%s5 + $0x28] sm:$0xff]
  %v1047 = vld [vmem:[%s5 + $0x30] sm:$0xff]
  %v1048 = vld [vmem:[%s5 + $0x38] sm:$0xff]
  %v1049 = vld [vmem:[%s5 + $0x40] sm:$0xff]
  %v1050 = vld [vmem:[%s5 + $0x48] sm:$0xff]
  %v1051 = vld [vmem:[%s5 + $0x50] sm:$0xff]
  %v1052 = vld [vmem:[%s5 + $0x58] sm:$0xff]
  %v1053 = vld [vmem:[%s5 + $0x60] sm:$0xff]
  %v1054 = vld [vmem:[%s5 + $0x68] sm:$0xff]
  %v1055 = vld [vmem:[%s5 + $0x70] sm:$0xff]
  %v1056 = vld [vmem:[%s5 + $0x78] sm:$0xff]
  %1057 = vmatprep.subr.mxu0 0.0
  %1058 = vmatpush1.msra.mxu0 %v1041
  %1059 = vmatprep.subr.mxu0 0.0
  %1060 = vmatpush1.msra.mxu0 %v1042
  %1061 = vmatprep.subr.mxu0 0.0
  %1062 = vmatpush1.msra.mxu0 %v1043
  %1063 = vmatprep.subr.mxu0 0.0
  %1064 = vmatpush1.msra.mxu0 %v1044
  %1065 = vmatprep.subr.mxu0 0.0
  %1066 = vmatpush1.msra.mxu0 %v1045
  %1067 = vmatprep.subr.mxu0 0.0
  %1068 = vmatpush1.msra.mxu0 %v1046
  %1069 = vmatprep.subr.mxu0 0.0
  %1070 = vmatpush1.msra.mxu0 %v1047
  %1071 = vmatprep.subr.mxu0 0.0
  %1072 = vmatpush1.msra.mxu0 %v1048
  %1073 = vmatprep.subr.mxu0 0.0
  %1074 = vmatpush1.msra.mxu0 %v1049
  %1075 = vmatprep.subr.mxu0 0.0
  %1076 = vmatpush1.msra.mxu0 %v1050
  %1077 = vmatprep.subr.mxu0 0.0
  %1078 = vmatpush1.msra.mxu0 %v1051
  %1079 = vmatprep.subr.mxu0 0.0
  %1080 = vmatpush1.msra.mxu0 %v1052
  %1081 = vmatprep.subr.mxu0 0.0
  %1082 = vmatpush1.msra.mxu0 %v1053
  %1083 = vmatprep.subr.mxu0 0.0
  %1084 = vmatpush1.msra.mxu0 %v1054
  %1085 = vmatprep.subr.mxu0 0.0
  %1086 = vmatpush1.msra.mxu0 %v1055
  %1087 = vmatprep.subr.mxu0 0.0
  %1088 = vmatpush1.msra.mxu0 %v1056
  %1089 = vmatprep.subr.mxu0 0.0
  %1090 = vmatpush1.msra.mxu0 0.0
  %1091 = vmatprep.subr.mxu0 0.0
  %1092 = vmatpush1.msra.mxu0 0.0
  %1093 = vmatprep.subr.mxu0 0.0
  %1094 = vmatpush1.msra.mxu0 0.0
  %1095 = vmatprep.subr.mxu0 0.0
  %1096 = vmatpush1.msra.mxu0 0.0
  %1097 = vmatprep.subr.mxu0 0.0
  %1098 = vmatpush1.msra.mxu0 0.0
  %1099 = vmatprep.subr.mxu0 0.0
  %1100 = vmatpush1.msra.mxu0 0.0
  %1101 = vmatprep.subr.mxu0 0.0
  %1102 = vmatpush1.msra.mxu0 0.0
  %1103 = vmatprep.subr.mxu0 0.0
  %1104 = vmatpush1.msra.mxu0 0.0
  %1105 = vmatprep.subr.mxu0 0.0
  %1106 = vmatpush1.msra.mxu0 0.0
  %1107 = vmatprep.subr.mxu0 0.0
  %1108 = vmatpush1.msra.mxu0 0.0
  %1109 = vmatprep.subr.mxu0 0.0
  %1110 = vmatpush1.msra.mxu0 0.0
  %1111 = vmatprep.subr.mxu0 0.0
  %1112 = vmatpush1.msra.mxu0 0.0
  %1113 = vmatprep.subr.mxu0 0.0
  %1114 = vmatpush1.msra.mxu0 0.0
  %1115 = vmatprep.subr.mxu0 0.0
  %1116 = vmatpush1.msra.mxu0 0.0
  %1117 = vmatprep.subr.mxu0 0.0
  %1118 = vmatpush1.msra.mxu0 0.0
  %1119 = vmatprep.subr.mxu0 0.0
  %1120 = vmatpush1.msra.mxu0 0.0
  %1121 = vmatprep.mubr.f32.mxu0 0.0
  %1122 = vmatmul.mubr.f32.gmra.mrb[0].mxu0 0.0
  %v1123 = vpop.f32.mrb[0].mxu0
  %v1124 = vadd.f32 0.0, %v1123
  %v1125 = vpop.f32.mrb[0].mxu0
  %1126 = vdwg.mxu0
  %v1127 = vadd.f32 %v1040, %v1124
  %v1128 = vtanh.pop %v1127
  %1129 = vst [vmem:[#allocation2] sm:$0xff] %v1128
  %v1130 = vld [vmem:[#allocation2 + $0x8] sm:$0xff]
  %v1131 = vld [vmem:[%s5] sm:$0xff]
  %v1132 = vld [vmem:[%s5 + $0x8] sm:$0xff]
  %v1133 = vld [vmem:[%s5 + $0x10] sm:$0xff]
  %v1134 = vld [vmem:[%s5 + $0x18] sm:$0xff]
  %v1135 = vld [vmem:[%s5 + $0x20] sm:$0xff]
  %v1136 = vld [vmem:[%s5 + $0x28] sm:$0xff]
  %v1137 = vld [vmem:[%s5 + $0x30] sm:$0xff]
  %v1138 = vld [vmem:[%s5 + $0x38] sm:$0xff]
  %v1139 = vld [vmem:[%s5 + $0x40] sm:$0xff]
  %v1140 = vld [vmem:[%s5 + $0x48] sm:$0xff]
  %v1141 = vld [vmem:[%s5 + $0x50] sm:$0xff]
  %v1142 = vld [vmem:[%s5 + $0x58] sm:$0xff]
  %v1143 = vld [vmem:[%s5 + $0x60] sm:$0xff]
  %v1144 = vld [vmem:[%s5 + $0x68] sm:$0xff]
  %v1145 = vld [vmem:[%s5 + $0x70] sm:$0xff]
  %v1146 = vld [vmem:[%s5 + $0x78] sm:$0xff]
  %1147 = vmatprep.subr.mxu0 0.0
  %1148 = vmatpush1.msra.mxu0 %v1131
  %1149 = vmatprep.subr.mxu0 0.0
  %1150 = vmatpush1.msra.mxu0 %v1132
  %1151 = vmatprep.subr.mxu0 0.0
  %1152 = vmatpush1.msra.mxu0 %v1133
  %1153 = vmatprep.subr.mxu0 0.0
  %1154 = vmatpush1.msra.mxu0 %v1134
  %1155 = vmatprep.subr.mxu0 0.0
  %1156 = vmatpush1.msra.mxu0 %v1135
  %1157 = vmatprep.subr.mxu0 0.0
  %1158 = vmatpush1.msra.mxu0 %v1136
  %1159 = vmatprep.subr.mxu0 0.0
  %1160 = vmatpush1.msra.mxu0 %v1137
  %1161 = vmatprep.subr.mxu0 0.0
  %1162 = vmatpush1.msra.mxu0 %v1138
  %1163 = vmatprep.subr.mxu0 0.0
  %1164 = vmatpush1.msra.mxu0 %v1139
  %1165 = vmatprep.subr.mxu0 0.0
  %1166 = vmatpush1.msra.mxu0 %v1140
  %1167 = vmatprep.subr.mxu0 0.0
  %1168 = vmatpush1.msra.mxu0 %v1141
  %1169 = vmatprep.subr.mxu0 0.0
  %1170 = vmatpush1.msra.mxu0 %v1142
  %1171 = vmatprep.subr.mxu0 0.0
  %1172 = vmatpush1.msra.mxu0 %v1143
  %1173 = vmatprep.subr.mxu0 0.0
  %1174 = vmatpush1.msra.mxu0 %v1144
  %1175 = vmatprep.subr.mxu0 0.0
  %1176 = vmatpush1.msra.mxu0 %v1145
  %1177 = vmatprep.subr.mxu0 0.0
  %1178 = vmatpush1.msra.mxu0 %v1146
  %1179 = vmatprep.subr.mxu0 0.0
  %1180 = vmatpush1.msra.mxu0 0.0
  %1181 = vmatprep.subr.mxu0 0.0
  %1182 = vmatpush1.msra.mxu0 0.0
  %1183 = vmatprep.subr.mxu0 0.0
  %1184 = vmatpush1.msra.mxu0 0.0
  %1185 = vmatprep.subr.mxu0 0.0
  %1186 = vmatpush1.msra.mxu0 0.0
  %1187 = vmatprep.subr.mxu0 0.0
  %1188 = vmatpush1.msra.mxu0 0.0
  %1189 = vmatprep.subr.mxu0 0.0
  %1190 = vmatpush1.msra.mxu0 0.0
  %1191 = vmatprep.subr.mxu0 0.0
  %1192 = vmatpush1.msra.mxu0 0.0
  %1193 = vmatprep.subr.mxu0 0.0
  %1194 = vmatpush1.msra.mxu0 0.0
  %1195 = vmatprep.subr.mxu0 0.0
  %1196 = vmatpush1.msra.mxu0 0.0
  %1197 = vmatprep.subr.mxu0 0.0
  %1198 = vmatpush1.msra.mxu0 0.0
  %1199 = vmatprep.subr.mxu0 0.0
  %1200 = vmatpush1.msra.mxu0 0.0
  %1201 = vmatprep.subr.mxu0 0.0
  %1202 = vmatpush1.msra.mxu0 0.0
  %1203 = vmatprep.subr.mxu0 0.0
  %1204 = vmatpush1.msra.mxu0 0.0
  %1205 = vmatprep.subr.mxu0 0.0
  %1206 = vmatpush1.msra.mxu0 0.0
  %1207 = vmatprep.subr.mxu0 0.0
  %1208 = vmatpush1.msra.mxu0 0.0
  %1209 = vmatprep.subr.mxu0 0.0
  %1210 = vmatpush1.msra.mxu0 0.0
  %1211 = vmatprep.mubr.f32.mxu0 0.0
  %1212 = vmatmul.mubr.f32.gmra.mrb[0].mxu0 %v1128
  %v1213 = vpop.f32.mrb[0].mxu0
  %v1214 = vadd.f32 0.0, %v1213
  %v1215 = vpop.f32.mrb[0].mxu0
  %1216 = vdwg.mxu0
  %v1217 = vadd.f32 %v1130, %v1214
  %v1218 = vtanh.pop %v1217
  %1219 = vst [vmem:[#allocation2 + $0x8] sm:$0xff] %v1218
  %v1220 = vld [vmem:[#allocation2 + $0x10] sm:$0xff]
  %v1221 = vld [vmem:[%s5] sm:$0xff]
  %v1222 = vld [vmem:[%s5 + $0x8] sm:$0xff]
  %v1223 = vld [vmem:[%s5 + $0x10] sm:$0xff]
  %v1224 = vld [vmem:[%s5 + $0x18] sm:$0xff]
  %v1225 = vld [vmem:[%s5 + $0x20] sm:$0xff]
  %v1226 = vld [vmem:[%s5 + $0x28] sm:$0xff]
  %v1227 = vld [vmem:[%s5 + $0x30] sm:$0xff]
  %v1228 = vld [vmem:[%s5 + $0x38] sm:$0xff]
  %v1229 = vld [vmem:[%s5 + $0x40] sm:$0xff]
  %v1230 = vld [vmem:[%s5 + $0x48] sm:$0xff]
  %v1231 = vld [vmem:[%s5 + $0x50] sm:$0xff]
  %v1232 = vld [vmem:[%s5 + $0x58] sm:$0xff]
  %v1233 = vld [vmem:[%s5 + $0x60] sm:$0xff]
  %v1234 = vld [vmem:[%s5 + $0x68] sm:$0xff]
  %v1235 = vld [vmem:[%s5 + $0x70] sm:$0xff]
  %v1236 = vld [vmem:[%s5 + $0x78] sm:$0xff]
  %1237 = vmatprep.subr.mxu0 0.0
  %1238 = vmatpush1.msra.mxu0 %v1221
  %1239 = vmatprep.subr.mxu0 0.0
  %1240 = vmatpush1.msra.mxu0 %v1222
  %1241 = vmatprep.subr.mxu0 0.0
  %1242 = vmatpush1.msra.mxu0 %v1223
  %1243 = vmatprep.subr.mxu0 0.0
  %1244 = vmatpush1.msra.mxu0 %v1224
  %1245 = vmatprep.subr.mxu0 0.0
  %1246 = vmatpush1.msra.mxu0 %v1225
  %1247 = vmatprep.subr.mxu0 0.0
  %1248 = vmatpush1.msra.mxu0 %v1226
  %1249 = vmatprep.subr.mxu0 0.0
  %1250 = vmatpush1.msra.mxu0 %v1227
  %1251 = vmatprep.subr.mxu0 0.0
  %1252 = vmatpush1.msra.mxu0 %v1228
  %1253 = vmatprep.subr.mxu0 0.0
  %1254 = vmatpush1.msra.mxu0 %v1229
  %1255 = vmatprep.subr.mxu0 0.0
  %1256 = vmatpush1.msra.mxu0 %v1230
  %1257 = vmatprep.subr.mxu0 0.0
  %1258 = vmatpush1.msra.mxu0 %v1231
  %1259 = vmatprep.subr.mxu0 0.0
  %1260 = vmatpush1.msra.mxu0 %v1232
  %1261 = vmatprep.subr.mxu0 0.0
  %1262 = vmatpush1.msra.mxu0 %v1233
  %1263 = vmatprep.subr.mxu0 0.0
  %1264 = vmatpush1.msra.mxu0 %v1234
  %1265 = vmatprep.subr.mxu0 0.0
  %1266 = vmatpush1.msra.mxu0 %v1235
  %1267 = vmatprep.subr.mxu0 0.0
  %1268 = vmatpush1.msra.mxu0 %v1236
  %1269 = vmatprep.subr.mxu0 0.0
  %1270 = vmatpush1.msra.mxu0 0.0
  %1271 = vmatprep.subr.mxu0 0.0
  %1272 = vmatpush1.msra.mxu0 0.0
  %1273 = vmatprep.subr.mxu0 0.0
  %1274 = vmatpush1.msra.mxu0 0.0
  %1275 = vmatprep.subr.mxu0 0.0
  %1276 = vmatpush1.msra.mxu0 0.0
  %1277 = vmatprep.subr.mxu0 0.0
  %1278 = vmatpush1.msra.mxu0 0.0
  %1279 = vmatprep.subr.mxu0 0.0
  %1280 = vmatpush1.msra.mxu0 0.0
  %1281 = vmatprep.subr.mxu0 0.0
  %1282 = vmatpush1.msra.mxu0 0.0
  %1283 = vmatprep.subr.mxu0 0.0
  %1284 = vmatpush1.msra.mxu0 0.0
  %1285 = vmatprep.subr.mxu0 0.0
  %1286 = vmatpush1.msra.mxu0 0.0
  %1287 = vmatprep.subr.mxu0 0.0
  %1288 = vmatpush1.msra.mxu0 0.0
  %1289 = vmatprep.subr.mxu0 0.0
  %1290 = vmatpush1.msra.mxu0 0.0
  %1291 = vmatprep.subr.mxu0 0.0
  %1292 = vmatpush1.msra.mxu0 0.0
  %1293 = vmatprep.subr.mxu0 0.0
  %1294 = vmatpush1.msra.mxu0 0.0
  %1295 = vmatprep.subr.mxu0 0.0
  %1296 = vmatpush1.msra.mxu0 0.0
  %1297 = vmatprep.subr.mxu0 0.0
  %1298 = vmatpush1.msra.mxu0 0.0
  %1299 = vmatprep.subr.mxu0 0.0
  %1300 = vmatpush1.msra.mxu0 0.0
  %1301 = vmatprep.mubr.f32.mxu0 0.0
  %1302 = vmatmul.mubr.f32.gmra.mrb[0].mxu0 %v1218
  %v1303 = vpop.f32.mrb[0].mxu0
  %v1304 = vadd.f32 0.0, %v1303
  %v1305 = vpop.f32.mrb[0].mxu0
  %1306 = vdwg.mxu0
  %v1307 = vadd.f32 %v1220, %v1304
  %v1308 = vtanh.pop %v1307
  %1309 = vst [vmem:[#allocation2 + $0x10] sm:$0xff] %v1308
  %v1310 = vld [vmem:[#allocation2 + $0x18] sm:$0xff]
  %v1311 = vld [vmem:[%s5] sm:$0xff]
  %v1312 = vld [vmem:[%s5 + $0x8] sm:$0xff]
  %v1313 = vld [vmem:[%s5 + $0x10] sm:$0xff]
  %v1314 = vld [vmem:[%s5 + $0x18] sm:$0xff]
  %v1315 = vld [vmem:[%s5 + $0x20] sm:$0xff]
  %v1316 = vld [vmem:[%s5 + $0x28] sm:$0xff]
  %v1317 = vld [vmem:[%s5 + $0x30] sm:$0xff]
  %v1318 = vld [vmem:[%s5 + $0x38] sm:$0xff]
  %v1319 = vld [vmem:[%s5 + $0x40] sm:$0xff]
  %v1320 = vld [vmem:[%s5 + $0x48] sm:$0xff]
  %v1321 = vld [vmem:[%s5 + $0x50] sm:$0xff]
  %v1322 = vld [vmem:[%s5 + $0x58] sm:$0xff]
  %v1323 = vld [vmem:[%s5 + $0x60] sm:$0xff]
  %v1324 = vld [vmem:[%s5 + $0x68] sm:$0xff]
  %v1325 = vld [vmem:[%s5 + $0x70] sm:$0xff]
  %v1326 = vld [vmem:[%s5 + $0x78] sm:$0xff]
  %1327 = vmatprep.subr.mxu0 0.0
  %1328 = vmatpush1.msra.mxu0 %v1311
  %1329 = vmatprep.subr.mxu0 0.0
  %1330 = vmatpush1.msra.mxu0 %v1312
  %1331 = vmatprep.subr.mxu0 0.0
  %1332 = vmatpush1.msra.mxu0 %v1313
  %1333 = vmatprep.subr.mxu0 0.0
  %1334 = vmatpush1.msra.mxu0 %v1314
  %1335 = vmatprep.subr.mxu0 0.0
  %1336 = vmatpush1.msra.mxu0 %v1315
  %1337 = vmatprep.subr.mxu0 0.0
  %1338 = vmatpush1.msra.mxu0 %v1316
  %1339 = vmatprep.subr.mxu0 0.0
  %1340 = vmatpush1.msra.mxu0 %v1317
  %1341 = vmatprep.subr.mxu0 0.0
  %1342 = vmatpush1.msra.mxu0 %v1318
  %1343 = vmatprep.subr.mxu0 0.0
  %1344 = vmatpush1.msra.mxu0 %v1319
  %1345 = vmatprep.subr.mxu0 0.0
  %1346 = vmatpush1.msra.mxu0 %v1320
  %1347 = vmatprep.subr.mxu0 0.0
  %1348 = vmatpush1.msra.mxu0 %v1321
  %1349 = vmatprep.subr.mxu0 0.0
  %1350 = vmatpush1.msra.mxu0 %v1322
  %1351 = vmatprep.subr.mxu0 0.0
  %1352 = vmatpush1.msra.mxu0 %v1323
  %1353 = vmatprep.subr.mxu0 0.0
  %1354 = vmatpush1.msra.mxu0 %v1324
  %1355 = vmatprep.subr.mxu0 0.0
  %1356 = vmatpush1.msra.mxu0 %v1325
  %1357 = vmatprep.subr.mxu0 0.0
  %1358 = vmatpush1.msra.mxu0 %v1326
  %1359 = vmatprep.subr.mxu0 0.0
  %1360 = vmatpush1.msra.mxu0 0.0
  %1361 = vmatprep.subr.mxu0 0.0
  %1362 = vmatpush1.msra.mxu0 0.0
  %1363 = vmatprep.subr.mxu0 0.0
  %1364 = vmatpush1.msra.mxu0 0.0
  %1365 = vmatprep.subr.mxu0 0.0
  %1366 = vmatpush1.msra.mxu0 0.0
  %1367 = vmatprep.subr.mxu0 0.0
  %1368 = vmatpush1.msra.mxu0 0.0
  %1369 = vmatprep.subr.mxu0 0.0
  %1370 = vmatpush1.msra.mxu0 0.0
  %1371 = vmatprep.subr.mxu0 0.0
  %1372 = vmatpush1.msra.mxu0 0.0
  %1373 = vmatprep.subr.mxu0 0.0
  %1374 = vmatpush1.msra.mxu0 0.0
  %1375 = vmatprep.subr.mxu0 0.0
  %1376 = vmatpush1.msra.mxu0 0.0
  %1377 = vmatprep.subr.mxu0 0.0
  %1378 = vmatpush1.msra.mxu0 0.0
  %1379 = vmatprep.subr.mxu0 0.0
  %1380 = vmatpush1.msra.mxu0 0.0
  %1381 = vmatprep.subr.mxu0 0.0
  %1382 = vmatpush1.msra.mxu0 0.0
  %1383 = vmatprep.subr.mxu0 0.0
  %1384 = vmatpush1.msra.mxu0 0.0
  %1385 = vmatprep.subr.mxu0 0.0
  %1386 = vmatpush1.msra.mxu0 0.0
  %1387 = vmatprep.subr.mxu0 0.0
  %1388 = vmatpush1.msra.mxu0 0.0
  %1389 = vmatprep.subr.mxu0 0.0
  %1390 = vmatpush1.msra.mxu0 0.0
  %1391 = vmatprep.mubr.f32.mxu0 0.0
  %1392 = vmatmul.mubr.f32.gmra.mrb[0].mxu0 %v1308
  %v1393 = vpop.f32.mrb[0].mxu0
  %v1394 = vadd.f32 0.0, %v1393
  %v1395 = vpop.f32.mrb[0].mxu0
  %1396 = vdwg.mxu0
  %v1397 = vadd.f32 %v1310, %v1394
  %v1398 = vtanh.pop %v1397
  %1399 = vst [vmem:[#allocation2 + $0x18] sm:$0xff] %v1398
  %v1400 = vld [vmem:[#allocation2 + $0x20] sm:$0xff]
  %v1401 = vld [vmem:[%s5] sm:$0xff]
  %v1402 = vld [vmem:[%s5 + $0x8] sm:$0xff]
  %v1403 = vld [vmem:[%s5 + $0x10] sm:$0xff]
  %v1404 = vld [vmem:[%s5 + $0x18] sm:$0xff]
  %v1405 = vld [vmem:[%s5 + $0x20] sm:$0xff]
  %v1406 = vld [vmem:[%s5 + $0x28] sm:$0xff]
  %v1407 = vld [vmem:[%s5 + $0x30] sm:$0xff]
  %v1408 = vld [vmem:[%s5 + $0x38] sm:$0xff]
  %v1409 = vld [vmem:[%s5 + $0x40] sm:$0xff]
  %v1410 = vld [vmem:[%s5 + $0x48] sm:$0xff]
  %v1411 = vld [vmem:[%s5 + $0x50] sm:$0xff]
  %v1412 = vld [vmem:[%s5 + $0x58] sm:$0xff]
  %v1413 = vld [vmem:[%s5 + $0x60] sm:$0xff]
  %v1414 = vld [vmem:[%s5 + $0x68] sm:$0xff]
  %v1415 = vld [vmem:[%s5 + $0x70] sm:$0xff]
  %v1416 = vld [vmem:[%s5 + $0x78] sm:$0xff]
  %1417 = vmatprep.subr.mxu0 0.0
  %1418 = vmatpush1.msra.mxu0 %v1401
  %1419 = vmatprep.subr.mxu0 0.0
  %1420 = vmatpush1.msra.mxu0 %v1402
  %1421 = vmatprep.subr.mxu0 0.0
  %1422 = vmatpush1.msra.mxu0 %v1403
  %1423 = vmatprep.subr.mxu0 0.0
  %1424 = vmatpush1.msra.mxu0 %v1404
  %1425 = vmatprep.subr.mxu0 0.0
  %1426 = vmatpush1.msra.mxu0 %v1405
  %1427 = vmatprep.subr.mxu0 0.0
  %1428 = vmatpush1.msra.mxu0 %v1406
  %1429 = vmatprep.subr.mxu0 0.0
  %1430 = vmatpush1.msra.mxu0 %v1407
  %1431 = vmatprep.subr.mxu0 0.0
  %1432 = vmatpush1.msra.mxu0 %v1408
  %1433 = vmatprep.subr.mxu0 0.0
  %1434 = vmatpush1.msra.mxu0 %v1409
  %1435 = vmatprep.subr.mxu0 0.0
  %1436 = vmatpush1.msra.mxu0 %v1410
  %1437 = vmatprep.subr.mxu0 0.0
  %1438 = vmatpush1.msra.mxu0 %v1411
  %1439 = vmatprep.subr.mxu0 0.0
  %1440 = vmatpush1.msra.mxu0 %v1412
  %1441 = vmatprep.subr.mxu0 0.0
  %1442 = vmatpush1.msra.mxu0 %v1413
  %1443 = vmatprep.subr.mxu0 0.0
  %1444 = vmatpush1.msra.mxu0 %v1414
  %1445 = vmatprep.subr.mxu0 0.0
  %1446 = vmatpush1.msra.mxu0 %v1415
  %1447 = vmatprep.subr.mxu0 0.0
  %1448 = vmatpush1.msra.mxu0 %v1416
  %1449 = vmatprep.subr.mxu0 0.0
  %1450 = vmatpush1.msra.mxu0 0.0
  %1451 = vmatprep.subr.mxu0 0.0
  %1452 = vmatpush1.msra.mxu0 0.0
  %1453 = vmatprep.subr.mxu0 0.0
  %1454 = vmatpush1.msra.mxu0 0.0
  %1455 = vmatprep.subr.mxu0 0.0
  %1456 = vmatpush1.msra.mxu0 0.0
  %1457 = vmatprep.subr.mxu0 0.0
  %1458 = vmatpush1.msra.mxu0 0.0
  %1459 = vmatprep.subr.mxu0 0.0
  %1460 = vmatpush1.msra.mxu0 0.0
  %1461 = vmatprep.subr.mxu0 0.0
  %1462 = vmatpush1.msra.mxu0 0.0
  %1463 = vmatprep.subr.mxu0 0.0
  %1464 = vmatpush1.msra.mxu0 0.0
  %1465 = vmatprep.subr.mxu0 0.0
  %1466 = vmatpush1.msra.mxu0 0.0
  %1467 = vmatprep.subr.mxu0 0.0
  %1468 = vmatpush1.msra.mxu0 0.0
  %1469 = vmatprep.subr.mxu0 0.0
  %1470 = vmatpush1.msra.mxu0 0.0
  %1471 = vmatprep.subr.mxu0 0.0
  %1472 = vmatpush1.msra.mxu0 0.0
  %1473 = vmatprep.subr.mxu0 0.0
  %1474 = vmatpush1.msra.mxu0 0.0
  %1475 = vmatprep.subr.mxu0 0.0
  %1476 = vmatpush1.msra.mxu0 0.0
  %1477 = vmatprep.subr.mxu0 0.0
  %1478 = vmatpush1.msra.mxu0 0.0
  %1479 = vmatprep.subr.mxu0 0.0
  %1480 = vmatpush1.msra.mxu0 0.0
  %1481 = vmatprep.mubr.f32.mxu0 0.0
  %1482 = vmatmul.mubr.f32.gmra.mrb[0].mxu0 %v1398
  %v1483 = vpop.f32.mrb[0].mxu0
  %v1484 = vadd.f32 0.0, %v1483
  %v1485 = vpop.f32.mrb[0].mxu0
  %1486 = vdwg.mxu0
  %v1487 = vadd.f32 %v1400, %v1484
  %v1488 = vtanh.pop %v1487
  %1489 = vst [vmem:[#allocation2 + $0x20] sm:$0xff] %v1488
  %v1490 = vld [vmem:[#allocation2 + $0x28] sm:$0xff]
  %v1491 = vld [vmem:[%s5] sm:$0xff]
  %v1492 = vld [vmem:[%s5 + $0x8] sm:$0xff]
  %v1493 = vld [vmem:[%s5 + $0x10] sm:$0xff]
  %v1494 = vld [vmem:[%s5 + $0x18] sm:$0xff]
  %v1495 = vld [vmem:[%s5 + $0x20] sm:$0xff]
  %v1496 = vld [vmem:[%s5 + $0x28] sm:$0xff]
  %v1497 = vld [vmem:[%s5 + $0x30] sm:$0xff]
  %v1498 = vld [vmem:[%s5 + $0x38] sm:$0xff]
  %v1499 = vld [vmem:[%s5 + $0x40] sm:$0xff]
  %v1500 = vld [vmem:[%s5 + $0x48] sm:$0xff]
  %v1501 = vld [vmem:[%s5 + $0x50] sm:$0xff]
  %v1502 = vld [vmem:[%s5 + $0x58] sm:$0xff]
  %v1503 = vld [vmem:[%s5 + $0x60] sm:$0xff]
  %v1504 = vld [vmem:[%s5 + $0x68] sm:$0xff]
  %v1505 = vld [vmem:[%s5 + $0x70] sm:$0xff]
  %v1506 = vld [vmem:[%s5 + $0x78] sm:$0xff]
  %1507 = vmatprep.subr.mxu0 0.0
  %1508 = vmatpush1.msra.mxu0 %v1491
  %1509 = vmatprep.subr.mxu0 0.0
  %1510 = vmatpush1.msra.mxu0 %v1492
  %1511 = vmatprep.subr.mxu0 0.0
  %1512 = vmatpush1.msra.mxu0 %v1493
  %1513 = vmatprep.subr.mxu0 0.0
  %1514 = vmatpush1.msra.mxu0 %v1494
  %1515 = vmatprep.subr.mxu0 0.0
  %1516 = vmatpush1.msra.mxu0 %v1495
  %1517 = vmatprep.subr.mxu0 0.0
  %1518 = vmatpush1.msra.mxu0 %v1496
  %1519 = vmatprep.subr.mxu0 0.0
  %1520 = vmatpush1.msra.mxu0 %v1497
  %1521 = vmatprep.subr.mxu0 0.0
  %1522 = vmatpush1.msra.mxu0 %v1498
  %1523 = vmatprep.subr.mxu0 0.0
  %1524 = vmatpush1.msra.mxu0 %v1499
  %1525 = vmatprep.subr.mxu0 0.0
  %1526 = vmatpush1.msra.mxu0 %v1500
  %1527 = vmatprep.subr.mxu0 0.0
  %1528 = vmatpush1.msra.mxu0 %v1501
  %1529 = vmatprep.subr.mxu0 0.0
  %1530 = vmatpush1.msra.mxu0 %v1502
  %1531 = vmatprep.subr.mxu0 0.0
  %1532 = vmatpush1.msra.mxu0 %v1503
  %1533 = vmatprep.subr.mxu0 0.0
  %1534 = vmatpush1.msra.mxu0 %v1504
  %1535 = vmatprep.subr.mxu0 0.0
  %1536 = vmatpush1.msra.mxu0 %v1505
  %1537 = vmatprep.subr.mxu0 0.0
  %1538 = vmatpush1.msra.mxu0 %v1506
  %1539 = vmatprep.subr.mxu0 0.0
  %1540 = vmatpush1.msra.mxu0 0.0
  %1541 = vmatprep.subr.mxu0 0.0
  %1542 = vmatpush1.msra.mxu0 0.0
  %1543 = vmatprep.subr.mxu0 0.0
  %1544 = vmatpush1.msra.mxu0 0.0
  %1545 = vmatprep.subr.mxu0 0.0
  %1546 = vmatpush1.msra.mxu0 0.0
  %1547 = vmatprep.subr.mxu0 0.0
  %1548 = vmatpush1.msra.mxu0 0.0
  %1549 = vmatprep.subr.mxu0 0.0
  %1550 = vmatpush1.msra.mxu0 0.0
  %1551 = vmatprep.subr.mxu0 0.0
  %1552 = vmatpush1.msra.mxu0 0.0
  %1553 = vmatprep.subr.mxu0 0.0
  %1554 = vmatpush1.msra.mxu0 0.0
  %1555 = vmatprep.subr.mxu0 0.0
  %1556 = vmatpush1.msra.mxu0 0.0
  %1557 = vmatprep.subr.mxu0 0.0
  %1558 = vmatpush1.msra.mxu0 0.0
  %1559 = vmatprep.subr.mxu0 0.0
  %1560 = vmatpush1.msra.mxu0 0.0
  %1561 = vmatprep.subr.mxu0 0.0
  %1562 = vmatpush1.msra.mxu0 0.0
  %1563 = vmatprep.subr.mxu0 0.0
  %1564 = vmatpush1.msra.mxu0 0.0
  %1565 = vmatprep.subr.mxu0 0.0
  %1566 = vmatpush1.msra.mxu0 0.0
  %1567 = vmatprep.subr.mxu0 0.0
  %1568 = vmatpush1.msra.mxu0 0.0
  %1569 = vmatprep.subr.mxu0 0.0
  %1570 = vmatpush1.msra.mxu0 0.0
  %1571 = vmatprep.mubr.f32.mxu0 0.0
  %1572 = vmatmul.mubr.f32.gmra.mrb[0].mxu0 %v1488
  %v1573 = vpop.f32.mrb[0].mxu0
  %v1574 = vadd.f32 0.0, %v1573
  %v1575 = vpop.f32.mrb[0].mxu0
  %1576 = vdwg.mxu0
  %v1577 = vadd.f32 %v1490, %v1574
  %v1578 = vtanh.pop %v1577
  %1579 = vst [vmem:[#allocation2 + $0x28] sm:$0xff] %v1578
  %v1580 = vld [vmem:[#allocation2 + $0x30] sm:$0xff]
  %v1581 = vld [vmem:[%s5] sm:$0xff]
  %v1582 = vld [vmem:[%s5 + $0x8] sm:$0xff]
  %v1583 = vld [vmem:[%s5 + $0x10] sm:$0xff]
  %v1584 = vld [vmem:[%s5 + $0x18] sm:$0xff]
  %v1585 = vld [vmem:[%s5 + $0x20] sm:$0xff]
  %v1586 = vld [vmem:[%s5 + $0x28] sm:$0xff]
  %v1587 = vld [vmem:[%s5 + $0x30] sm:$0xff]
  %v1588 = vld [vmem:[%s5 + $0x38] sm:$0xff]
  %v1589 = vld [vmem:[%s5 + $0x40] sm:$0xff]
  %v1590 = vld [vmem:[%s5 + $0x48] sm:$0xff]
  %v1591 = vld [vmem:[%s5 + $0x50] sm:$0xff]
  %v1592 = vld [vmem:[%s5 + $0x58] sm:$0xff]
  %v1593 = vld [vmem:[%s5 + $0x60] sm:$0xff]
  %v1594 = vld [vmem:[%s5 + $0x68] sm:$0xff]
  %v1595 = vld [vmem:[%s5 + $0x70] sm:$0xff]
  %v1596 = vld [vmem:[%s5 + $0x78] sm:$0xff]
  %1597 = vmatprep.subr.mxu0 0.0
  %1598 = vmatpush1.msra.mxu0 %v1581
  %1599 = vmatprep.subr.mxu0 0.0
  %1600 = vmatpush1.msra.mxu0 %v1582
  %1601 = vmatprep.subr.mxu0 0.0
  %1602 = vmatpush1.msra.mxu0 %v1583
  %1603 = vmatprep.subr.mxu0 0.0
  %1604 = vmatpush1.msra.mxu0 %v1584
  %1605 = vmatprep.subr.mxu0 0.0
  %1606 = vmatpush1.msra.mxu0 %v1585
  %1607 = vmatprep.subr.mxu0 0.0
  %1608 = vmatpush1.msra.mxu0 %v1586
  %1609 = vmatprep.subr.mxu0 0.0
  %1610 = vmatpush1.msra.mxu0 %v1587
  %1611 = vmatprep.subr.mxu0 0.0
  %1612 = vmatpush1.msra.mxu0 %v1588
  %1613 = vmatprep.subr.mxu0 0.0
  %1614 = vmatpush1.msra.mxu0 %v1589
  %1615 = vmatprep.subr.mxu0 0.0
  %1616 = vmatpush1.msra.mxu0 %v1590
  %1617 = vmatprep.subr.mxu0 0.0
  %1618 = vmatpush1.msra.mxu0 %v1591
  %1619 = vmatprep.subr.mxu0 0.0
  %1620 = vmatpush1.msra.mxu0 %v1592
  %1621 = vmatprep.subr.mxu0 0.0
  %1622 = vmatpush1.msra.mxu0 %v1593
  %1623 = vmatprep.subr.mxu0 0.0
  %1624 = vmatpush1.msra.mxu0 %v1594
  %1625 = vmatprep.subr.mxu0 0.0
  %1626 = vmatpush1.msra.mxu0 %v1595
  %1627 = vmatprep.subr.mxu0 0.0
  %1628 = vmatpush1.msra.mxu0 %v1596
  %1629 = vmatprep.subr.mxu0 0.0
  %1630 = vmatpush1.msra.mxu0 0.0
  %1631 = vmatprep.subr.mxu0 0.0
  %1632 = vmatpush1.msra.mxu0 0.0
  %1633 = vmatprep.subr.mxu0 0.0
  %1634 = vmatpush1.msra.mxu0 0.0
  %1635 = vmatprep.subr.mxu0 0.0
  %1636 = vmatpush1.msra.mxu0 0.0
  %1637 = vmatprep.subr.mxu0 0.0
  %1638 = vmatpush1.msra.mxu0 0.0
  %1639 = vmatprep.subr.mxu0 0.0
  %1640 = vmatpush1.msra.mxu0 0.0
  %1641 = vmatprep.subr.mxu0 0.0
  %1642 = vmatpush1.msra.mxu0 0.0
  %1643 = vmatprep.subr.mxu0 0.0
  %1644 = vmatpush1.msra.mxu0 0.0
  %1645 = vmatprep.subr.mxu0 0.0
  %1646 = vmatpush1.msra.mxu0 0.0
  %1647 = vmatprep.subr.mxu0 0.0
  %1648 = vmatpush1.msra.mxu0 0.0
  %1649 = vmatprep.subr.mxu0 0.0
  %1650 = vmatpush1.msra.mxu0 0.0
  %1651 = vmatprep.subr.mxu0 0.0
  %1652 = vmatpush1.msra.mxu0 0.0
  %1653 = vmatprep.subr.mxu0 0.0
  %1654 = vmatpush1.msra.mxu0 0.0
  %1655 = vmatprep.subr.mxu0 0.0
  %1656 = vmatpush1.msra.mxu0 0.0
  %1657 = vmatprep.subr.mxu0 0.0
  %1658 = vmatpush1.msra.mxu0 0.0
  %1659 = vmatprep.subr.mxu0 0.0
  %1660 = vmatpush1.msra.mxu0 0.0
  %1661 = vmatprep.mubr.f32.mxu0 0.0
  %1662 = vmatmul.mubr.f32.gmra.mrb[0].mxu0 %v1578
  %v1663 = vpop.f32.mrb[0].mxu0
  %v1664 = vadd.f32 0.0, %v1663
  %v1665 = vpop.f32.mrb[0].mxu0
  %1666 = vdwg.mxu0
  %v1667 = vadd.f32 %v1580, %v1664
  %v1668 = vtanh.pop %v1667
  %1669 = vst [vmem:[#allocation2 + $0x30] sm:$0xff] %v1668
  %v1670 = vld [vmem:[#allocation2 + $0x38] sm:$0xff]
  %v1671 = vld [vmem:[%s5] sm:$0xff]
  %v1672 = vld [vmem:[%s5 + $0x8] sm:$0xff]
  %v1673 = vld [vmem:[%s5 + $0x10] sm:$0xff]
  %v1674 = vld [vmem:[%s5 + $0x18] sm:$0xff]
  %v1675 = vld [vmem:[%s5 + $0x20] sm:$0xff]
  %v1676 = vld [vmem:[%s5 + $0x28] sm:$0xff]
  %v1677 = vld [vmem:[%s5 + $0x30] sm:$0xff]
  %v1678 = vld [vmem:[%s5 + $0x38] sm:$0xff]
  %v1679 = vld [vmem:[%s5 + $0x40] sm:$0xff]
  %v1680 = vld [vmem:[%s5 + $0x48] sm:$0xff]
  %v1681 = vld [vmem:[%s5 + $0x50] sm:$0xff]
  %v1682 = vld [vmem:[%s5 + $0x58] sm:$0xff]
  %v1683 = vld [vmem:[%s5 + $0x60] sm:$0xff]
  %v1684 = vld [vmem:[%s5 + $0x68] sm:$0xff]
  %v1685 = vld [vmem:[%s5 + $0x70] sm:$0xff]
  %v1686 = vld [vmem:[%s5 + $0x78] sm:$0xff]
  %1687 = vmatprep.subr.mxu0 0.0
  %1688 = vmatpush1.msra.mxu0 %v1671
  %1689 = vmatprep.subr.mxu0 0.0
  %1690 = vmatpush1.msra.mxu0 %v1672
  %1691 = vmatprep.subr.mxu0 0.0
  %1692 = vmatpush1.msra.mxu0 %v1673
  %1693 = vmatprep.subr.mxu0 0.0
  %1694 = vmatpush1.msra.mxu0 %v1674
  %1695 = vmatprep.subr.mxu0 0.0
  %1696 = vmatpush1.msra.mxu0 %v1675
  %1697 = vmatprep.subr.mxu0 0.0
  %1698 = vmatpush1.msra.mxu0 %v1676
  %1699 = vmatprep.subr.mxu0 0.0
  %1700 = vmatpush1.msra.mxu0 %v1677
  %1701 = vmatprep.subr.mxu0 0.0
  %1702 = vmatpush1.msra.mxu0 %v1678
  %1703 = vmatprep.subr.mxu0 0.0
  %1704 = vmatpush1.msra.mxu0 %v1679
  %1705 = vmatprep.subr.mxu0 0.0
  %1706 = vmatpush1.msra.mxu0 %v1680
  %1707 = vmatprep.subr.mxu0 0.0
  %1708 = vmatpush1.msra.mxu0 %v1681
  %1709 = vmatprep.subr.mxu0 0.0
  %1710 = vmatpush1.msra.mxu0 %v1682
  %1711 = vmatprep.subr.mxu0 0.0
  %1712 = vmatpush1.msra.mxu0 %v1683
  %1713 = vmatprep.subr.mxu0 0.0
  %1714 = vmatpush1.msra.mxu0 %v1684
  %1715 = vmatprep.subr.mxu0 0.0
  %1716 = vmatpush1.msra.mxu0 %v1685
  %1717 = vmatprep.subr.mxu0 0.0
  %1718 = vmatpush1.msra.mxu0 %v1686
  %1719 = vmatprep.subr.mxu0 0.0
  %1720 = vmatpush1.msra.mxu0 0.0
  %1721 = vmatprep.subr.mxu0 0.0
  %1722 = vmatpush1.msra.mxu0 0.0
  %1723 = vmatprep.subr.mxu0 0.0
  %1724 = vmatpush1.msra.mxu0 0.0
  %1725 = vmatprep.subr.mxu0 0.0
  %1726 = vmatpush1.msra.mxu0 0.0
  %1727 = vmatprep.subr.mxu0 0.0
  %1728 = vmatpush1.msra.mxu0 0.0
  %1729 = vmatprep.subr.mxu0 0.0
  %1730 = vmatpush1.msra.mxu0 0.0
  %1731 = vmatprep.subr.mxu0 0.0
  %1732 = vmatpush1.msra.mxu0 0.0
  %1733 = vmatprep.subr.mxu0 0.0
  %1734 = vmatpush1.msra.mxu0 0.0
  %1735 = vmatprep.subr.mxu0 0.0
  %1736 = vmatpush1.msra.mxu0 0.0
  %1737 = vmatprep.subr.mxu0 0.0
  %1738 = vmatpush1.msra.mxu0 0.0
  %1739 = vmatprep.subr.mxu0 0.0
  %1740 = vmatpush1.msra.mxu0 0.0
  %1741 = vmatprep.subr.mxu0 0.0
  %1742 = vmatpush1.msra.mxu0 0.0
  %1743 = vmatprep.subr.mxu0 0.0
  %1744 = vmatpush1.msra.mxu0 0.0
  %1745 = vmatprep.subr.mxu0 0.0
  %1746 = vmatpush1.msra.mxu0 0.0
  %1747 = vmatprep.subr.mxu0 0.0
  %1748 = vmatpush1.msra.mxu0 0.0
  %1749 = vmatprep.subr.mxu0 0.0
  %1750 = vmatpush1.msra.mxu0 0.0
  %1751 = vmatprep.mubr.f32.mxu0 0.0
  %1752 = vmatmul.mubr.f32.gmra.mrb[0].mxu0 %v1668
  %v1753 = vpop.f32.mrb[0].mxu0
  %v1754 = vadd.f32 0.0, %v1753
  %v1755 = vpop.f32.mrb[0].mxu0
  %1756 = vdwg.mxu0
  %v1757 = vadd.f32 %v1670, %v1754
  %v1758 = vtanh.pop %v1757
  %1759 = vst [vmem:[#allocation2 + $0x38] sm:$0xff] %v1758
  %v1760 = vld [vmem:[#allocation2] sm:$0xff]
  %v1761 = vld [vmem:[#allocation2 + $0x8] sm:$0xff]
  %v1762 = vld [vmem:[#allocation2 + $0x10] sm:$0xff]
  %v1763 = vld [vmem:[#allocation2 + $0x18] sm:$0xff]
  %v1764 = vld [vmem:[#allocation2 + $0x20] sm:$0xff]
  %v1765 = vld [vmem:[#allocation2 + $0x28] sm:$0xff]
  %v1766 = vld [vmem:[#allocation2 + $0x30] sm:$0xff]
  %v1767 = vld [vmem:[#allocation2 + $0x38] sm:$0xff]
  %v1768 = vld [vmem:[%s7] sm:$0xff]
  %v1769 = vld [vmem:[%s7 + $0x8] sm:$0xff]
  %v1770 = vld [vmem:[%s7 + $0x10] sm:$0xff]
  %v1771 = vld [vmem:[%s7 + $0x18] sm:$0xff]
  %v1772 = vld [vmem:[%s7 + $0x20] sm:$0xff]
  %v1773 = vld [vmem:[%s7 + $0x28] sm:$0xff]
  %v1774 = vld [vmem:[%s7 + $0x30] sm:$0xff]
  %v1775 = vld [vmem:[%s7 + $0x38] sm:$0xff]
  %v1776 = vld [vmem:[%s7 + $0x40] sm:$0xff]
  %v1777 = vld [vmem:[%s7 + $0x48] sm:$0xff]
  %v1778 = vld [vmem:[%s7 + $0x50] sm:$0xff]
  %v1779 = vld [vmem:[%s7 + $0x58] sm:$0xff]
  %v1780 = vld [vmem:[%s7 + $0x60] sm:$0xff]
  %v1781 = vld [vmem:[%s7 + $0x68] sm:$0xff]
  %v1782 = vld [vmem:[%s7 + $0x70] sm:$0xff]
  %v1783 = vld [vmem:[%s7 + $0x78] sm:$0xff]
  %v1784 = vld [vmem:[%s8] sm:$0x1]
  %v1786 = vlaneseq
  %v1787 = vshrl.u32 %v1786, 7
  %v1788 = vsub.s32 0, %v1787
  %v1789 = vrot.slane %v1784, %v1788
  %1791 = vmatprep.subr.mxu0 0.0
  %1792 = vmatpush1.msra.mxu0 %v1768
  %1793 = vmatprep.subr.mxu0 0.0
  %1794 = vmatpush1.msra.mxu0 %v1769
  %1795 = vmatprep.subr.mxu0 0.0
  %1796 = vmatpush1.msra.mxu0 %v1770
  %1797 = vmatprep.subr.mxu0 0.0
  %1798 = vmatpush1.msra.mxu0 %v1771
  %1799 = vmatprep.subr.mxu0 0.0
  %1800 = vmatpush1.msra.mxu0 %v1772
  %1801 = vmatprep.subr.mxu0 0.0
  %1802 = vmatpush1.msra.mxu0 %v1773
  %1803 = vmatprep.subr.mxu0 0.0
  %1804 = vmatpush1.msra.mxu0 %v1774
  %1805 = vmatprep.subr.mxu0 0.0
  %1806 = vmatpush1.msra.mxu0 %v1775
  %1807 = vmatprep.subr.mxu0 0.0
  %1808 = vmatpush1.msra.mxu0 %v1776
  %1809 = vmatprep.subr.mxu0 0.0
  %1810 = vmatpush1.msra.mxu0 %v1777
  %1811 = vmatprep.subr.mxu0 0.0
  %1812 = vmatpush1.msra.mxu0 %v1778
  %1813 = vmatprep.subr.mxu0 0.0
  %1814 = vmatpush1.msra.mxu0 %v1779
  %1815 = vmatprep.subr.mxu0 0.0
  %1816 = vmatpush1.msra.mxu0 %v1780
  %1817 = vmatprep.subr.mxu0 0.0
  %1818 = vmatpush1.msra.mxu0 %v1781
  %1819 = vmatprep.subr.mxu0 0.0
  %1820 = vmatpush1.msra.mxu0 %v1782
  %1821 = vmatprep.subr.mxu0 0.0
  %1822 = vmatpush1.msra.mxu0 %v1783
  %1823 = vmatprep.subr.mxu0 0.0
  %1824 = vmatpush1.msra.mxu0 0.0
  %1825 = vmatprep.subr.mxu0 0.0
  %1826 = vmatpush1.msra.mxu0 0.0
  %1827 = vmatprep.subr.mxu0 0.0
  %1828 = vmatpush1.msra.mxu0 0.0
  %1829 = vmatprep.subr.mxu0 0.0
  %1830 = vmatpush1.msra.mxu0 0.0
  %1831 = vmatprep.subr.mxu0 0.0
  %1832 = vmatpush1.msra.mxu0 0.0
  %1833 = vmatprep.subr.mxu0 0.0
  %1834 = vmatpush1.msra.mxu0 0.0
  %1835 = vmatprep.subr.mxu0 0.0
  %1836 = vmatpush1.msra.mxu0 0.0
  %1837 = vmatprep.subr.mxu0 0.0
  %1838 = vmatpush1.msra.mxu0 0.0
  %1839 = vmatprep.subr.mxu0 0.0
  %1840 = vmatpush1.msra.mxu0 0.0
  %1841 = vmatprep.subr.mxu0 0.0
  %1842 = vmatpush1.msra.mxu0 0.0
  %1843 = vmatprep.subr.mxu0 0.0
  %1844 = vmatpush1.msra.mxu0 0.0
  %1845 = vmatprep.subr.mxu0 0.0
  %1846 = vmatpush1.msra.mxu0 0.0
  %1847 = vmatprep.subr.mxu0 0.0
  %1848 = vmatpush1.msra.mxu0 0.0
  %1849 = vmatprep.subr.mxu0 0.0
  %1850 = vmatpush1.msra.mxu0 0.0
  %1851 = vmatprep.subr.mxu0 0.0
  %1852 = vmatpush1.msra.mxu0 0.0
  %1853 = vmatprep.subr.mxu0 0.0
  %1854 = vmatpush1.msra.mxu0 0.0
  %1855 = vmatprep.mubr.f32.mxu0 0.0
  %1856 = vmatmul.mubr.f32.gmra.mrb[0].mxu0 %v1760
  %v1857 = vpop.f32.mrb[0].mxu0
  %v1858 = vadd.f32 %v1789, %v1857
  %v1859 = vpop.f32.mrb[0].mxu0
  %1860 = vmatprep.mubr.f32.mxu0 0.0
  %1861 = vmatmul.mubr.f32.gmra.mrb[0].mxu0 %v1761
  %v1862 = vpop.f32.mrb[0].mxu0
  %v1863 = vadd.f32 %v1789, %v1862
  %v1864 = vpop.f32.mrb[0].mxu0
  %1865 = vmatprep.mubr.f32.mxu0 0.0
  %1866 = vmatmul.mubr.f32.gmra.mrb[0].mxu0 %v1762
  %v1867 = vpop.f32.mrb[0].mxu0
  %v1868 = vadd.f32 %v1789, %v1867
  %v1869 = vpop.f32.mrb[0].mxu0
  %1870 = vmatprep.mubr.f32.mxu0 0.0
  %1871 = vmatmul.mubr.f32.gmra.mrb[0].mxu0 %v1763
  %v1872 = vpop.f32.mrb[0].mxu0
  %v1873 = vadd.f32 %v1789, %v1872
  %v1874 = vpop.f32.mrb[0].mxu0
  %1875 = vmatprep.mubr.f32.mxu0 0.0
  %1876 = vmatmul.mubr.f32.gmra.mrb[0].mxu0 %v1764
  %v1877 = vpop.f32.mrb[0].mxu0
  %v1878 = vadd.f32 %v1789, %v1877
  %v1879 = vpop.f32.mrb[0].mxu0
  %1880 = vmatprep.mubr.f32.mxu0 0.0
  %1881 = vmatmul.mubr.f32.gmra.mrb[0].mxu0 %v1765
  %v1882 = vpop.f32.mrb[0].mxu0
  %v1883 = vadd.f32 %v1789, %v1882
  %v1884 = vpop.f32.mrb[0].mxu0
  %1885 = vmatprep.mubr.f32.mxu0 0.0
  %1886 = vmatmul.mubr.f32.gmra.mrb[0].mxu0 %v1766
  %v1887 = vpop.f32.mrb[0].mxu0
  %v1888 = vadd.f32 %v1789, %v1887
  %v1889 = vpop.f32.mrb[0].mxu0
  %1890 = vmatprep.mubr.f32.mxu0 0.0
  %1891 = vmatmul.mubr.f32.gmra.mrb[0].mxu0 %v1767
  %v1892 = vpop.f32.mrb[0].mxu0
  %v1893 = vadd.f32 %v1789, %v1892
  %v1894 = vpop.f32.mrb[0].mxu0
  %1895 = vdwg.mxu0
  %1896 = vst [vmem:[%s9] sm:$0xff] %v1858
  %1897 = vst [vmem:[%s9 + $0x8] sm:$0xff] %v1863
  %1898 = vst [vmem:[%s9 + $0x10] sm:$0xff] %v1868
  %1899 = vst [vmem:[%s9 + $0x18] sm:$0xff] %v1873
  %1900 = vst [vmem:[%s9 + $0x20] sm:$0xff] %v1878
  %1901 = vst [vmem:[%s9 + $0x28] sm:$0xff] %v1883
  %1902 = vst [vmem:[%s9 + $0x30] sm:$0xff] %v1888
  %1903 = vst [vmem:[%s9 + $0x38] sm:$0xff] %v1893
  // Predicated region
  $region38: #{rnn_model_forward.1} parent=0 // pred_check
    _
  $region39: #{rnn_model_forward.1} parent=0 // pred_check_branch
    %1905 = sbr.rel (0) target = $region41
  $region40: #{rnn_model_forward.1} parent=0 // pred_region
    _
  $region41: #{rnn_model_forward.1} parent=0 // pred_fallthru
    _
  // Predicated region
  $region42: #{rnn_model_forward.1} parent=0 // pred_check
    _
  $region43: #{rnn_model_forward.1} parent=0 // pred_check_branch
    %1907 = sbr.rel (0) target = $region45
  $region44: #{rnn_model_forward.1} parent=0 // pred_region
    _
  $region45: #{rnn_model_forward.1} parent=0 // pred_fallthru
    _

</llo_original>
